<compile_context>
chip_gen: v7x
topology: tpu7x:2x2x1
jax: 0.10.0
libtpu: 0.0.40
codegen_flags: <defaults>
</compile_context>

<pallas_src>
import functools

import jax
import jax.numpy as jnp
import numpy as np
from jax.experimental import pallas as pl
from jax.experimental.pallas import tpu as pltpu


# ----------------------------------------------------------------------------
# Kernel
# ----------------------------------------------------------------------------
def _audio_encoder_kernel(x_ref, wf_ref, bf_ref, wp_ref, bp_ref, o_ref,
                          acc_ref, *, inv_t):
    """Grid = (batch tiles, time tiles).

    x_ref : (TB, Tt, F) framed audio tile (f32 or bf16)
    wf_ref: (F, H)      frame-embedding weight (synthetic backbone), bf16
    bf_ref: (1, H)      frame-embedding bias, f32
    wp_ref: (H, D)      projection weight, bf16
    bp_ref: (1, D)      projection bias, f32
    o_ref : (TB, D)     encoded output, f32 (resident across the t axis)
    acc_ref:(TB, F)     f32 pool accumulator (scratch, resident)
    """
    t = pl.program_id(1)

    @pl.when(t == 0)
    def _():
        acc_ref[...] = jnp.zeros_like(acc_ref)

    # Partial frame-sum for this time tile; f32 accumulation regardless of the
    # x dtype (x may be fed as bf16 to halve the HBM read, which is the
    # roofline for this kernel).
    acc_ref[...] += jnp.sum(x_ref[...].astype(jnp.float32), axis=1)

    @pl.when(t == pl.num_programs(1) - 1)
    def _():
        # Mean over ALL T frames (inv_t = 1/T baked in at trace time).
        pooled = acc_ref[...] * inv_t                                # (TB, F)

        # Synthetic backbone frame embedding: bf16 MXU inputs, f32 accumulate,
        # bias added once to the pooled block (pool-before-matmul is valid
        # because the stand-in backbone is linear: mean(XW+b) == mean(X)W+b).
        feat = jnp.dot(pooled.astype(jnp.bfloat16), wf_ref[...],
                       preferred_element_type=jnp.float32) + bf_ref[...]

        # Projection head (== nn.Linear(hidden, output_dim)).
        out = jnp.dot(feat.astype(jnp.bfloat16), wp_ref[...],
                      preferred_element_type=jnp.float32) + bp_ref[...]

        o_ref[...] = out.astype(o_ref.dtype)


# ----------------------------------------------------------------------------
# Tile selection (VMEM-budget driven)
# ----------------------------------------------------------------------------
_TILE_VMEM_BUDGET = 24 << 20   # bytes for pipelined tiles + resident weights;
                               # fits the 32 MiB scoped default on v6e/v7x and
                               # leaves headroom under v7x's 64 MiB physical
                               # VMEM (v5e/v6e have 128 MiB physical).


def _tile_vmem_bytes(tb, tt, F, H, D, x_itemsize, weight_bufs=2):
    x_tile = 2 * tb * tt * F * x_itemsize                 # double-buffered x
    out_tile = 2 * tb * D * 4                             # double-buffered out
    weights = weight_bufs * ((F * H + H * D) * 2 + (H + D) * 4)  # bf16 W, f32 b
    acc = tb * F * 4                                      # pool accumulator
    return x_tile + out_tile + weights + acc


def _pick_tiles(B, T, F, H, D, x_itemsize, budget=_TILE_VMEM_BUDGET):
    """Pick (TB, Tt).  TB is a multiple of 8 (sublane) or full B; even batch
    step counts are preferred (v7x TensorCore balance).  Tt is the largest
    multiple-of-8 divisor of T (or full T) whose tile fits the VMEM budget."""
    def fits(tb, tt):
        return _tile_vmem_bytes(tb, tt, F, H, D, x_itemsize) <= budget

    # --- batch tile ---------------------------------------------------------
    cands = sorted((d for d in range(8, min(B, 256) + 1, 8) if B % d == 0),
                   reverse=True)
    min_tt = min(8, T)
    tb = None
    if B >= 16:
        for d in cands:                       # prefer an even number of steps
            if (B // d) % 2 == 0 and fits(d, min_tt):
                tb = d
                break
    if tb is None:
        for d in cands:                       # else largest that fits
            if fits(d, min_tt):
                tb = d
                break
    if tb is None:
        tb = B                                # small / odd batch: full block

    # --- time tile ----------------------------------------------------------
    tt_cands = sorted({T} | {d for d in range(8, T + 1, 8) if T % d == 0},
                      reverse=True)
    tt = tt_cands[-1]
    for d in tt_cands:                        # largest that fits the budget
        if fits(tb, d):
            tt = d
            break
    return tb, tt


# ----------------------------------------------------------------------------
# pallas_call builder + wrapper
# ----------------------------------------------------------------------------
def _build_call(B, T, F, H, D, TB, Tt, x_dtype, single_buffer_weights):
    # Resident weights/biases: constant index maps (fetched once).  With
    # pl.Buffered(1) they are not double-buffered, freeing VMEM for the x tile.
    wkw = dict(pipeline_mode=pl.Buffered(1)) if single_buffer_weights else {}

    grid_spec = pltpu.PrefetchScalarGridSpec(
        num_scalar_prefetch=0,
        grid=(B // TB, T // Tt),
        in_specs=[
            pl.BlockSpec((TB, Tt, F), lambda b, t: (b, t, 0)),   # x frames
            pl.BlockSpec((F, H), lambda b, t: (0, 0), **wkw),    # wf
            pl.BlockSpec((1, H), lambda b, t: (0, 0), **wkw),    # bf
            pl.BlockSpec((H, D), lambda b, t: (0, 0), **wkw),    # wp
            pl.BlockSpec((1, D), lambda b, t: (0, 0), **wkw),    # bp
        ],
        out_specs=pl.BlockSpec((TB, D), lambda b, t: (b, 0)),    # resident out
        scratch_shapes=[pltpu.VMEM((TB, F), jnp.float32)],       # pool acc
    )

    needed = _tile_vmem_bytes(TB, Tt, F, H, D, jnp.dtype(x_dtype).itemsize,
                              weight_bufs=1 if single_buffer_weights else 2)
    vmem_limit = int(min(max(needed + (4 << 20), 32 << 20), 48 << 20))

    return pl.pallas_call(
        functools.partial(_audio_encoder_kernel, inv_t=1.0 / T),
        out_shape=jax.ShapeDtypeStruct((B, D), jnp.float32),
        grid_spec=grid_spec,
        compiler_params=pltpu.CompilerParams(
            dimension_semantics=("parallel", "arbitrary"),
            vmem_limit_bytes=vmem_limit),
    )


def audio_encoder_forward(x, w_feat, b_feat, w_proj, b_proj, *,
                          frame_size, batch_tile=None, time_tile=None):
    """x: (B, L) raw audio (f32 or bf16). Returns (B, output_dim) float32."""
    B, L = x.shape
    F = frame_size
    assert L % F == 0, "audio length must be a multiple of frame_size"
    T = L // F
    H = w_feat.shape[1]
    D = w_proj.shape[1]

    tb_auto, tt_auto = _pick_tiles(B, T, F, H, D, jnp.dtype(x.dtype).itemsize)
    TB = batch_tile if batch_tile is not None else tb_auto
    Tt = time_tile if time_tile is not None else tt_auto
    assert B % TB == 0, "batch must be a multiple of the batch tile"
    assert T % Tt == 0, "frame count must be a multiple of the time tile"

    x_frames = x.reshape(B, T, F)             # glue: framing in plain JAX

    # bf16 weights for the MXU; biases stay f32 (added after f32 accumulation).
    # (Optional further rewrite — precompose wf @ wp — is valid only while the
    #  stand-in backbone stays linear; not done, to keep the module structure.)
    wf = w_feat.astype(jnp.bfloat16)
    wp = w_proj.astype(jnp.bfloat16)
    bf = b_feat.reshape(1, H).astype(jnp.float32)
    bp = b_proj.reshape(1, D).astype(jnp.float32)

    args = (x_frames, wf, bf, wp, bp)
    try:
        return _build_call(B, T, F, H, D, TB, Tt, x.dtype,
                           single_buffer_weights=True)(*args)
    except Exception:
        # pl.Buffered(1) single-buffering of resident weights is a pure VMEM
        # optimization; fall back to default double-buffering if this
        # jax/libtpu build rejects the pipeline_mode request.
        return _build_call(B, T, F, H, D, TB, Tt, x.dtype,
                           single_buffer_weights=False)(*args)


def reference_forward(x, w_feat, b_feat, w_proj, b_proj, *, frame_size):
    """Pure-JAX f32 reference of the same computation (for verification)."""
    B, L = x.shape
    T = L // frame_size
    frames = x.reshape(B, T, frame_size)
    feat = jnp.einsum("btf,fh->bth", frames, w_feat) + b_feat
    pooled = feat.mean(axis=1)
    return pooled @ w_proj + b_proj


if __name__ == "__main__":
    # Small shapes consistent with the module's forward:
    #   x: (batch, sequence_length) raw audio
    B = 16               # tiles to TB=8 -> 2 even batch steps (v7x TC balance)
    FRAME = 128          # frame size of the synthetic feature extractor
    T = 16               # number of frames
    L = T * FRAME        # raw audio length (2048 samples)
    HIDDEN = 256         # stand-in for wav2vec2 hidden_size (768 in the paper)
    OUT_DIM = 128        # stand-in for output_dim (768 default)

    key = jax.random.PRNGKey(0)
    kx, kwf, kbf, kwp, kbp = jax.random.split(key, 5)

    x = jax.random.normal(kx, (B, L), dtype=jnp.float32)

    # Deterministic parameter init (synthetic; no checkpoint load).
    w_feat = jax.random.normal(kwf, (FRAME, HIDDEN), dtype=jnp.float32) * 0.02
    b_feat = jax.random.normal(kbf, (HIDDEN,), dtype=jnp.float32) * 0.02
    w_proj = jax.random.normal(kwp, (HIDDEN, OUT_DIM), dtype=jnp.float32) * 0.02
    b_proj = jax.random.normal(kbp, (OUT_DIM,), dtype=jnp.float32) * 0.02

    ref = jax.block_until_ready(
        reference_forward(x, w_feat, b_feat, w_proj, b_proj, frame_size=FRAME))

    # 1) auto-picked tiles (VMEM-budget heuristic -> TB=8, Tt=16 here).
    out_auto = jax.block_until_ready(
        audio_encoder_forward(x, w_feat, b_feat, w_proj, b_proj,
                              frame_size=FRAME))
    # 2) explicit tiles exercising the multi-step time reduction (2x2 grid).
    out_tiled = jax.block_until_ready(
        audio_encoder_forward(x, w_feat, b_feat, w_proj, b_proj,
                              frame_size=FRAME, batch_tile=8, time_tile=8))

    for out in (out_auto, out_tiled):
        assert out.shape == (B, OUT_DIM), out.shape
        # bf16 MXU inputs with f32 accumulation vs. f32 reference -> loose tol.
        np.testing.assert_allclose(np.asarray(out), np.asarray(ref),
                                   rtol=2e-2, atol=2e-3)
    print("KERNEL_OK")
</pallas_src>

<mosaic_0001>
module attributes {stable_mosaic.version = 11 : i64} {
  func.func @_audio_encoder_kernel(%arg0: i32, %arg1: i32, %arg2: memref<8x16x128xf32, #tpu.memory_space<vmem>>, %arg3: memref<128x256xbf16, #tpu.memory_space<vmem>>, %arg4: memref<1x256xf32, #tpu.memory_space<vmem>>, %arg5: memref<256x128xbf16, #tpu.memory_space<vmem>>, %arg6: memref<1x128xf32, #tpu.memory_space<vmem>>, %arg7: memref<8x128xf32, #tpu.memory_space<vmem>>, %arg8: memref<8x128xf32, #tpu.memory_space<vmem>>) attributes {dimension_semantics = [#tpu.dimension_semantics<parallel>, #tpu.dimension_semantics<arbitrary>], iteration_bounds = array<i64: 2, 1>, scalar_prefetch = 0 : i64, scratch_operands = 1 : i64, tpu.core_type = #tpu.core_type<tc>, window_params = [{transform_indices = @transform_0, window_bounds = array<i64: 8, 16, 128>}, {pipeline_mode = #tpu.pipeline_mode<synchronous>, transform_indices = @transform_1, window_bounds = array<i64: 128, 256>}, {pipeline_mode = #tpu.pipeline_mode<synchronous>, transform_indices = @transform_2, window_bounds = array<i64: 1, 256>}, {pipeline_mode = #tpu.pipeline_mode<synchronous>, transform_indices = @transform_3, window_bounds = array<i64: 256, 128>}, {pipeline_mode = #tpu.pipeline_mode<synchronous>, transform_indices = @transform_4, window_bounds = array<i64: 1, 128>}, {transform_indices = @transform_5, window_bounds = array<i64: 8, 128>}]} {
    %c0_i32 = arith.constant 0 : i32
    %0 = arith.cmpi eq, %arg1, %c0_i32 : i32
    %1 = arith.extui %0 : i1 to i32
    %c0_i32_0 = arith.constant 0 : i32
    %2 = arith.cmpi ne, %1, %c0_i32_0 : i32
    scf.if %2 {
      %cst_9 = arith.constant 0.000000e+00 : f32
      %11 = vector.broadcast %cst_9 : f32 to vector<8x128xf32>
      %c0_10 = arith.constant 0 : index
      %c0_11 = arith.constant 0 : index
      %12 = vector.load %arg8[%c0_10, %c0_11] : memref<8x128xf32, #tpu.memory_space<vmem>>, vector<8x128xf32>
      tpu.vector_store %arg8[%c0_10, %c0_11], %11 {strides = array<i32>} : memref<8x128xf32, #tpu.memory_space<vmem>>, vector<8x128xf32>,
    } else {
    }
    %c0 = arith.constant 0 : index
    %c0_1 = arith.constant 0 : index
    %3 = vector.load %arg8[%c0, %c0_1] : memref<8x128xf32, #tpu.memory_space<vmem>>, vector<8x128xf32>
    %c0_2 = arith.constant 0 : index
    %c0_3 = arith.constant 0 : index
    %c0_4 = arith.constant 0 : index
    %4 = vector.load %arg2[%c0_2, %c0_3, %c0_4] : memref<8x16x128xf32, #tpu.memory_space<vmem>>, vector<8x16x128xf32>
    %cst = arith.constant dense<0.000000e+00> : vector<8x128xf32>
    %5 = vector.multi_reduction <add>, %4, %cst [1] : vector<8x16x128xf32> to vector<8x128xf32>
    %6 = arith.addf %3, %5 : vector<8x128xf32>
    %c0_5 = arith.constant 0 : index
    %c0_6 = arith.constant 0 : index
    %7 = vector.load %arg8[%c0_5, %c0_6] : memref<8x128xf32, #tpu.memory_space<vmem>>, vector<8x128xf32>
    tpu.vector_store %arg8[%c0_5, %c0_6], %6 {strides = array<i32>} : memref<8x128xf32, #tpu.memory_space<vmem>>, vector<8x128xf32>,
    %c0_i32_7 = arith.constant 0 : i32
    %8 = arith.cmpi eq, %arg1, %c0_i32_7 : i32
    %9 = arith.extui %8 : i1 to i32
    %c0_i32_8 = arith.constant 0 : i32
    %10 = arith.cmpi ne, %9, %c0_i32_8 : i32
    scf.if %10 {
      %c0_9 = arith.constant 0 : index
      %c0_10 = arith.constant 0 : index
      %11 = vector.load %arg8[%c0_9, %c0_10] : memref<8x128xf32, #tpu.memory_space<vmem>>, vector<8x128xf32>
      %cst_11 = arith.constant 6.250000e-02 : f32
      %12 = vector.broadcast %cst_11 : f32 to vector<8x128xf32>
      %13 = arith.mulf %11, %12 : vector<8x128xf32>
      %14 = arith.truncf %13 : vector<8x128xf32> to vector<8x128xbf16>
      %c0_12 = arith.constant 0 : index
      %c0_13 = arith.constant 0 : index
      %15 = vector.load %arg3[%c0_12, %c0_13] : memref<128x256xbf16, #tpu.memory_space<vmem>>, vector<128x256xbf16>
      %cst_14 = arith.constant dense<0.000000e+00> : vector<8x256xf32>
      %16 = tpu.matmul %14, %15, %cst_14 {dimension_numbers = #tpu.dot_dimension_numbers<[1], [0], [0], [1], [0, 0, 1, 1], [], []>} : vector<8x128xbf16>, vector<128x256xbf16>, vector<8x256xf32> -> vector<8x256xf32>
      %c0_15 = arith.constant 0 : index
      %c0_16 = arith.constant 0 : index
      %17 = vector.load %arg4[%c0_15, %c0_16] : memref<1x256xf32, #tpu.memory_space<vmem>>, vector<1x256xf32>
      %18 = vector.broadcast %17 : vector<1x256xf32> to vector<8x256xf32>
      %19 = arith.addf %16, %18 : vector<8x256xf32>
      %20 = arith.truncf %19 : vector<8x256xf32> to vector<8x256xbf16>
      %c0_17 = arith.constant 0 : index
      %c0_18 = arith.constant 0 : index
      %21 = vector.load %arg5[%c0_17, %c0_18] : memref<256x128xbf16, #tpu.memory_space<vmem>>, vector<256x128xbf16>
      %cst_19 = arith.constant dense<0.000000e+00> : vector<8x128xf32>
      %22 = tpu.matmul %20, %21, %cst_19 {dimension_numbers = #tpu.dot_dimension_numbers<[1], [0], [0], [1], [0, 0, 1, 1], [], []>} : vector<8x256xbf16>, vector<256x128xbf16>, vector<8x128xf32> -> vector<8x128xf32>
      %c0_20 = arith.constant 0 : index
      %c0_21 = arith.constant 0 : index
      %23 = vector.load %arg6[%c0_20, %c0_21] : memref<1x128xf32, #tpu.memory_space<vmem>>, vector<1x128xf32>
      %24 = vector.broadcast %23 : vector<1x128xf32> to vector<8x128xf32>
      %25 = arith.addf %22, %24 : vector<8x128xf32>
      %c0_22 = arith.constant 0 : index
      %c0_23 = arith.constant 0 : index
      %26 = vector.load %arg7[%c0_22, %c0_23] : memref<8x128xf32, #tpu.memory_space<vmem>>, vector<8x128xf32>
      tpu.vector_store %arg7[%c0_22, %c0_23], %25 {strides = array<i32>} : memref<8x128xf32, #tpu.memory_space<vmem>>, vector<8x128xf32>,
    } else {
    }
    return
  }
  func.func @transform_0(%arg0: i32, %arg1: i32) -> (i32, i32, i32) {
    %c0_i32 = arith.constant 0 : i32
    %c0_i32_0 = arith.constant 0 : i32
    return %arg0, %arg1, %c0_i32 : i32, i32, i32
  }
  func.func @transform_1(%arg0: i32, %arg1: i32) -> (i32, i32) {
    %c0_i32 = arith.constant 0 : i32
    %c0_i32_0 = arith.constant 0 : i32
    %c0_i32_1 = arith.constant 0 : i32
    return %c0_i32, %c0_i32_0 : i32, i32
  }
  func.func @transform_2(%arg0: i32, %arg1: i32) -> (i32, i32) {
    %c0_i32 = arith.constant 0 : i32
    %c0_i32_0 = arith.constant 0 : i32
    %c0_i32_1 = arith.constant 0 : i32
    return %c0_i32, %c0_i32_0 : i32, i32
  }
  func.func @transform_3(%arg0: i32, %arg1: i32) -> (i32, i32) {
    %c0_i32 = arith.constant 0 : i32
    %c0_i32_0 = arith.constant 0 : i32
    %c0_i32_1 = arith.constant 0 : i32
    return %c0_i32, %c0_i32_0 : i32, i32
  }
  func.func @transform_4(%arg0: i32, %arg1: i32) -> (i32, i32) {
    %c0_i32 = arith.constant 0 : i32
    %c0_i32_0 = arith.constant 0 : i32
    %c0_i32_1 = arith.constant 0 : i32
    return %c0_i32, %c0_i32_0 : i32, i32
  }
  func.func @transform_5(%arg0: i32, %arg1: i32) -> (i32, i32) {
    %c0_i32 = arith.constant 0 : i32
    %c0_i32_0 = arith.constant 0 : i32
    return %arg0, %c0_i32 : i32, i32
  }
}

module attributes {stable_mosaic.version = 11 : i64} {
  func.func @_audio_encoder_kernel(%arg0: i32, %arg1: i32, %arg2: memref<8x16x128xf32, #tpu.memory_space<vmem>>, %arg3: memref<128x256xbf16, #tpu.memory_space<vmem>>, %arg4: memref<1x256xf32, #tpu.memory_space<vmem>>, %arg5: memref<256x128xbf16, #tpu.memory_space<vmem>>, %arg6: memref<1x128xf32, #tpu.memory_space<vmem>>, %arg7: memref<8x128xf32, #tpu.memory_space<vmem>>, %arg8: memref<8x128xf32, #tpu.memory_space<vmem>>) attributes {dimension_semantics = [#tpu.dimension_semantics<parallel>, #tpu.dimension_semantics<arbitrary>], iteration_bounds = array<i64: 2, 1>, scalar_prefetch = 0 : i64, scratch_operands = 1 : i64, tpu.core_type = #tpu.core_type<tc>, window_params = [{transform_indices = @transform_0, window_bounds = array<i64: 8, 16, 128>}, {pipeline_mode = #tpu.pipeline_mode<synchronous>, transform_indices = @transform_1, window_bounds = array<i64: 128, 256>}, {pipeline_mode = #tpu.pipeline_mode<synchronous>, transform_indices = @transform_2, window_bounds = array<i64: 1, 256>}, {pipeline_mode = #tpu.pipeline_mode<synchronous>, transform_indices = @transform_3, window_bounds = array<i64: 256, 128>}, {pipeline_mode = #tpu.pipeline_mode<synchronous>, transform_indices = @transform_4, window_bounds = array<i64: 1, 128>}, {transform_indices = @transform_5, window_bounds = array<i64: 8, 128>}]} {
    %c0_i32 = arith.constant 0 : i32
    %0 = arith.cmpi eq, %arg1, %c0_i32 : i32
    %1 = arith.extui %0 : i1 to i32
    %c0_i32_0 = arith.constant 0 : i32
    %2 = arith.cmpi ne, %1, %c0_i32_0 : i32
    scf.if %2 {
      %cst_9 = arith.constant 0.000000e+00 : f32
      %11 = vector.broadcast %cst_9 : f32 to vector<8x128xf32>
      %c0_10 = arith.constant 0 : index
      %c0_11 = arith.constant 0 : index
      %12 = vector.load %arg8[%c0_10, %c0_11] : memref<8x128xf32, #tpu.memory_space<vmem>>, vector<8x128xf32>
      tpu.vector_store %arg8[%c0_10, %c0_11], %11 {strides = array<i32>} : memref<8x128xf32, #tpu.memory_space<vmem>>, vector<8x128xf32>,
    } else {
    }
    %c0 = arith.constant 0 : index
    %c0_1 = arith.constant 0 : index
    %3 = vector.load %arg8[%c0, %c0_1] : memref<8x128xf32, #tpu.memory_space<vmem>>, vector<8x128xf32>
    %c0_2 = arith.constant 0 : index
    %c0_3 = arith.constant 0 : index
    %c0_4 = arith.constant 0 : index
    %4 = vector.load %arg2[%c0_2, %c0_3, %c0_4] : memref<8x16x128xf32, #tpu.memory_space<vmem>>, vector<8x16x128xf32>
    %cst = arith.constant dense<0.000000e+00> : vector<8x128xf32>
    %5 = vector.multi_reduction <add>, %4, %cst [1] : vector<8x16x128xf32> to vector<8x128xf32>
    %6 = arith.addf %3, %5 : vector<8x128xf32>
    %c0_5 = arith.constant 0 : index
    %c0_6 = arith.constant 0 : index
    %7 = vector.load %arg8[%c0_5, %c0_6] : memref<8x128xf32, #tpu.memory_space<vmem>>, vector<8x128xf32>
    tpu.vector_store %arg8[%c0_5, %c0_6], %6 {strides = array<i32>} : memref<8x128xf32, #tpu.memory_space<vmem>>, vector<8x128xf32>,
    %c0_i32_7 = arith.constant 0 : i32
    %8 = arith.cmpi eq, %arg1, %c0_i32_7 : i32
    %9 = arith.extui %8 : i1 to i32
    %c0_i32_8 = arith.constant 0 : i32
    %10 = arith.cmpi ne, %9, %c0_i32_8 : i32
    scf.if %10 {
      %c0_9 = arith.constant 0 : index
      %c0_10 = arith.constant 0 : index
      %11 = vector.load %arg8[%c0_9, %c0_10] : memref<8x128xf32, #tpu.memory_space<vmem>>, vector<8x128xf32>
      %cst_11 = arith.constant 6.250000e-02 : f32
      %12 = vector.broadcast %cst_11 : f32 to vector<8x128xf32>
      %13 = arith.mulf %11, %12 : vector<8x128xf32>
      %14 = arith.truncf %13 : vector<8x128xf32> to vector<8x128xbf16>
      %c0_12 = arith.constant 0 : index
      %c0_13 = arith.constant 0 : index
      %15 = vector.load %arg3[%c0_12, %c0_13] : memref<128x256xbf16, #tpu.memory_space<vmem>>, vector<128x256xbf16>
      %cst_14 = arith.constant dense<0.000000e+00> : vector<8x256xf32>
      %16 = tpu.matmul %14, %15, %cst_14 {dimension_numbers = #tpu.dot_dimension_numbers<[1], [0], [0], [1], [0, 0, 1, 1], [], []>} : vector<8x128xbf16>, vector<128x256xbf16>, vector<8x256xf32> -> vector<8x256xf32>
      %c0_15 = arith.constant 0 : index
      %c0_16 = arith.constant 0 : index
      %17 = vector.load %arg4[%c0_15, %c0_16] : memref<1x256xf32, #tpu.memory_space<vmem>>, vector<1x256xf32>
      %18 = vector.broadcast %17 : vector<1x256xf32> to vector<8x256xf32>
      %19 = arith.addf %16, %18 : vector<8x256xf32>
      %20 = arith.truncf %19 : vector<8x256xf32> to vector<8x256xbf16>
      %c0_17 = arith.constant 0 : index
      %c0_18 = arith.constant 0 : index
      %21 = vector.load %arg5[%c0_17, %c0_18] : memref<256x128xbf16, #tpu.memory_space<vmem>>, vector<256x128xbf16>
      %cst_19 = arith.constant dense<0.000000e+00> : vector<8x128xf32>
      %22 = tpu.matmul %20, %21, %cst_19 {dimension_numbers = #tpu.dot_dimension_numbers<[1], [0], [0], [1], [0, 0, 1, 1], [], []>} : vector<8x256xbf16>, vector<256x128xbf16>, vector<8x128xf32> -> vector<8x128xf32>
      %c0_20 = arith.constant 0 : index
      %c0_21 = arith.constant 0 : index
      %23 = vector.load %arg6[%c0_20, %c0_21] : memref<1x128xf32, #tpu.memory_space<vmem>>, vector<1x128xf32>
      %24 = vector.broadcast %23 : vector<1x128xf32> to vector<8x128xf32>
      %25 = arith.addf %22, %24 : vector<8x128xf32>
      %c0_22 = arith.constant 0 : index
      %c0_23 = arith.constant 0 : index
      %26 = vector.load %arg7[%c0_22, %c0_23] : memref<8x128xf32, #tpu.memory_space<vmem>>, vector<8x128xf32>
      tpu.vector_store %arg7[%c0_22, %c0_23], %25 {strides = array<i32>} : memref<8x128xf32, #tpu.memory_space<vmem>>, vector<8x128xf32>,
    } else {
    }
    return
  }
  func.func @transform_0(%arg0: i32, %arg1: i32) -> (i32, i32, i32) {
    %c0_i32 = arith.constant 0 : i32
    %c0_i32_0 = arith.constant 0 : i32
    return %arg0, %arg1, %c0_i32 : i32, i32, i32
  }
  func.func @transform_1(%arg0: i32, %arg1: i32) -> (i32, i32) {
    %c0_i32 = arith.constant 0 : i32
    %c0_i32_0 = arith.constant 0 : i32
    %c0_i32_1 = arith.constant 0 : i32
    return %c0_i32, %c0_i32_0 : i32, i32
  }
  func.func @transform_2(%arg0: i32, %arg1: i32) -> (i32, i32) {
    %c0_i32 = arith.constant 0 : i32
    %c0_i32_0 = arith.constant 0 : i32
    %c0_i32_1 = arith.constant 0 : i32
    return %c0_i32, %c0_i32_0 : i32, i32
  }
  func.func @transform_3(%arg0: i32, %arg1: i32) -> (i32, i32) {
    %c0_i32 = arith.constant 0 : i32
    %c0_i32_0 = arith.constant 0 : i32
    %c0_i32_1 = arith.constant 0 : i32
    return %c0_i32, %c0_i32_0 : i32, i32
  }
  func.func @transform_4(%arg0: i32, %arg1: i32) -> (i32, i32) {
    %c0_i32 = arith.constant 0 : i32
    %c0_i32_0 = arith.constant 0 : i32
    %c0_i32_1 = arith.constant 0 : i32
    return %c0_i32, %c0_i32_0 : i32, i32
  }
  func.func @transform_5(%arg0: i32, %arg1: i32) -> (i32, i32) {
    %c0_i32 = arith.constant 0 : i32
    %c0_i32_0 = arith.constant 0 : i32
    return %arg0, %c0_i32 : i32, i32
  }
}

</mosaic_0001>

<llo_original>
// kernel: tpu_custom_call.1
$region0: #{tpu_custom_call.1}
  #allocation0 [shape = 'u32[]', space=smem, size = 0x4, offset = 0x4, fixed_abs, tag = 'smem constant byte address 0x4 - core index']
  #allocation1 [shape = 'u32[144,128]{1,0:T(1,128)}', space=vmem, size = 0x12000, scoped, tag = 'internal scratch']
  #allocation2 [shape = 'f32[8,128]{1,0:T(8,128)}', space=vmem, size = 0x1000, scoped, tag = 'scratch operand']
  %s0 = inlined_call_operand.hbm [shape: f32[16,16,128], index: 0, kind: input, shape index: {}]
  %s1 = inlined_call_operand.hbm [shape: bf16[128,256], index: 1, kind: input, shape index: {}]
  %s2 = inlined_call_operand.vmem [shape: f32[1,256], index: 2, kind: input, shape index: {}]
  %s3 = inlined_call_operand.hbm [shape: bf16[256,128], index: 3, kind: input, shape index: {}]
  %s4 = inlined_call_operand.vmem [shape: f32[1,128], index: 4, kind: input, shape index: {}]
  %s5 = inlined_call_operand.hbm [shape: f32[16,128], index: 5, kind: output, shape index: {}]
  %s6 = sld [smem:[#allocation0]]
  $region73: #{tpu_custom_call.1} parent=0
    _
  %s8 = ssub.s32 1, %s6
  %s9 = scalar_select 0, %s8, %s6
  $region1: #{tpu_custom_call.1} parent=0
    #allocation3 [shape = 'u8[131072]{0}', space=vmem, size = 0x20000, scoped, tag = 'input window, operand 0']
    #allocation4 [shape = 's32[2]{0}', space=sflag, size = 0x8, scoped, tag = 'scoped memory for tpu_custom_call.1']
    #allocation5 [shape = 's32[2]{0}', space=sflag, size = 0x8, scoped, tag = 'scoped memory for tpu_custom_call.1']
    #allocation6 [shape = 'u8[65536]{0}', space=vmem, size = 0x10000, scoped, tag = 'input window, operand 1, single buffered']
    #allocation7 [shape = 's32[1]{0}', space=sflag, size = 0x4, scoped, tag = 'scoped memory for tpu_custom_call.1']
    #allocation8 [shape = 'u8[65536]{0}', space=vmem, size = 0x10000, scoped, tag = 'input window, operand 3, single buffered']
    #allocation9 [shape = 'u8[8192]{0}', space=vmem, size = 0x2000, scoped, tag = 'output window, operand 0']
    %10 = vsyncpa [#allocation4], 0
    %s11 = scalar_lea.sflag [#allocation4], 1
    %12 = vsyncpa %s11, 0
    %13 = vsyncpa [#allocation7], 0
    %14 = vsyncpa [#allocation5], 0
    %s15 = scalar_lea.sflag [#allocation5], 1
    %16 = vsyncpa %s15, 0
    loop: start=0, step=1, limit=4
    $region2: #{tpu_custom_call.1} parent=1 // loop_pre_header
      _
    $region3: #{tpu_custom_call.1} parent=1 // loop_header
      %s18 = sphi 0, %s22
      %p19 = scmp.ge.s32.totalorder %s18, 4
      %s25 = sphi 0, %s37
      %s26 = sphi 0, %s33
      %s27 = sphi 0, %s25
      %s28 = sphi 0, %s26
      %s29 = sphi 0, %s27
      %s30 = sphi 0, %s28
      %s42 = sphi 0, %s44
      %s45 = sphi 0, %s42
      %s46 = sphi 0, %s45
      %s62 = sphi 0, %s46
      %s66 = sphi 0, %s66
      %s68 = sphi 0, %s66
      %s69 = sphi 0, %s68
      %s83 = sphi 0, %s69
      %s87 = sphi 0, %s87
      %s89 = sphi 0, %s87
      %s90 = sphi 0, %s89
      %s104 = sphi 0, %s90
      %s108 = sphi 0, %s108
      %s110 = sphi 0, %s108
      %s111 = sphi 0, %s110
      %s125 = sphi 0, %s111
      %s129 = sphi 0, %s129
      %s131 = sphi 0, %s129
      %s132 = sphi 0, %s131
      %s146 = sphi 0, %s132
      %s152 = sphi 0, %s154
      %s155 = sphi 0, %s152
      %s156 = sphi 0, %s155
      %s172 = sphi 0, %s156
    $region4: #{tpu_custom_call.1} parent=1 // loop_header_branch
      %21 = sbr.rel (%p19) target = $region8
    $region5: #{tpu_custom_call.1} parent=1 // loop_body
      %s23 = ssub.s32 %s18, 1
      %s24 = ssub.s32 %s18, 2
      %s31 = sadd.s32 1, %s26
      %p32 = scmp.ge.s32.totalorder %s31, 1
      %s33 = scalar_select %p32, 0, %s31
      %s34 = sadd.s32 1, %s25
      %s35 = scalar_select %p32, %s34, %s25
      %p36 = scmp.ge.s32.totalorder %s35, 2
      %s37 = scalar_select %p36, 0, %s35
      %s38 = ssub.s32 %s25, %s37
      %s39 = ssub.s32 %s26, %s33
      %s40 = sor.u32 %s38, %s39
      %p41 = scmp.eq.s32.totalorder %s40, 0
      %s43 = sadd.s32 %s42, 1
      %s44 = scalar_select %p41, %s42, %s43
      %p47 = pneg %p41
      %p48 = scmp.eq.s32.totalorder %s18, 1
      %p49 = por %p47, %p48
      %p50 = scmp.ne.s32.totalorder %s42, %s45
      %p51 = scmp.eq.s32.totalorder %s18, 0
      %p52 = por %p50, %p51
      %p53 = scmp.ne.s32.totalorder %s42, %s45
      %p54 = scmp.eq.s32.totalorder %s23, 1
      %p55 = por %p53, %p54
      %p56 = scmp.ne.s32.totalorder %s45, %s46
      %p57 = scmp.eq.s32.totalorder %s23, 0
      %p58 = por %p56, %p57
      %p59 = scmp.ne.s32.totalorder %s45, %s46
      %p60 = scmp.eq.s32.totalorder %s24, 1
      %p61 = por %p59, %p60
      %p63 = scmp.ne.s32.totalorder %s46, %s62
      %p64 = scmp.eq.s32.totalorder %s24, 0
      %p65 = por %p63, %p64
      %s67 = sadd.s32 %s66, 1
      %p70 = scmp.eq.s32.totalorder %s18, 1
      %p71 = scmp.ne.s32.totalorder %s66, %s68
      %p72 = scmp.eq.s32.totalorder %s18, 0
      %p73 = por %p71, %p72
      %p74 = scmp.ne.s32.totalorder %s66, %s68
      %p75 = scmp.eq.s32.totalorder %s23, 1
      %p76 = por %p74, %p75
      %p77 = scmp.ne.s32.totalorder %s68, %s69
      %p78 = scmp.eq.s32.totalorder %s23, 0
      %p79 = por %p77, %p78
      %p80 = scmp.ne.s32.totalorder %s68, %s69
      %p81 = scmp.eq.s32.totalorder %s24, 1
      %p82 = por %p80, %p81
      %p84 = scmp.ne.s32.totalorder %s69, %s83
      %p85 = scmp.eq.s32.totalorder %s24, 0
      %p86 = por %p84, %p85
      %s88 = sadd.s32 %s87, 1
      %p91 = scmp.eq.s32.totalorder %s18, 1
      %p92 = scmp.ne.s32.totalorder %s87, %s89
      %p93 = scmp.eq.s32.totalorder %s18, 0
      %p94 = por %p92, %p93
      %p95 = scmp.ne.s32.totalorder %s87, %s89
      %p96 = scmp.eq.s32.totalorder %s23, 1
      %p97 = por %p95, %p96
      %p98 = scmp.ne.s32.totalorder %s89, %s90
      %p99 = scmp.eq.s32.totalorder %s23, 0
      %p100 = por %p98, %p99
      %p101 = scmp.ne.s32.totalorder %s89, %s90
      %p102 = scmp.eq.s32.totalorder %s24, 1
      %p103 = por %p101, %p102
      %p105 = scmp.ne.s32.totalorder %s90, %s104
      %p106 = scmp.eq.s32.totalorder %s24, 0
      %p107 = por %p105, %p106
      %s109 = sadd.s32 %s108, 1
      %p112 = scmp.eq.s32.totalorder %s18, 1
      %p113 = scmp.ne.s32.totalorder %s108, %s110
      %p114 = scmp.eq.s32.totalorder %s18, 0
      %p115 = por %p113, %p114
      %p116 = scmp.ne.s32.totalorder %s108, %s110
      %p117 = scmp.eq.s32.totalorder %s23, 1
      %p118 = por %p116, %p117
      %p119 = scmp.ne.s32.totalorder %s110, %s111
      %p120 = scmp.eq.s32.totalorder %s23, 0
      %p121 = por %p119, %p120
      %p122 = scmp.ne.s32.totalorder %s110, %s111
      %p123 = scmp.eq.s32.totalorder %s24, 1
      %p124 = por %p122, %p123
      %p126 = scmp.ne.s32.totalorder %s111, %s125
      %p127 = scmp.eq.s32.totalorder %s24, 0
      %p128 = por %p126, %p127
      %s130 = sadd.s32 %s129, 1
      %p133 = scmp.eq.s32.totalorder %s18, 1
      %p134 = scmp.ne.s32.totalorder %s129, %s131
      %p135 = scmp.eq.s32.totalorder %s18, 0
      %p136 = por %p134, %p135
      %p137 = scmp.ne.s32.totalorder %s129, %s131
      %p138 = scmp.eq.s32.totalorder %s23, 1
      %p139 = por %p137, %p138
      %p140 = scmp.ne.s32.totalorder %s131, %s132
      %p141 = scmp.eq.s32.totalorder %s23, 0
      %p142 = por %p140, %p141
      %p143 = scmp.ne.s32.totalorder %s131, %s132
      %p144 = scmp.eq.s32.totalorder %s24, 1
      %p145 = por %p143, %p144
      %p147 = scmp.ne.s32.totalorder %s132, %s146
      %p148 = scmp.eq.s32.totalorder %s24, 0
      %p149 = por %p147, %p148
      %s150 = ssub.s32 %s25, %s37
      %p151 = scmp.eq.s32.totalorder %s150, 0
      %s153 = sadd.s32 %s152, 1
      %s154 = scalar_select %p151, %s152, %s153
      %p157 = pneg %p151
      %p158 = scmp.eq.s32.totalorder %s18, 1
      %p159 = por %p157, %p158
      %p160 = scmp.ne.s32.totalorder %s152, %s155
      %p161 = scmp.eq.s32.totalorder %s18, 0
      %p162 = por %p160, %p161
      %p163 = scmp.ne.s32.totalorder %s152, %s155
      %p164 = scmp.eq.s32.totalorder %s23, 1
      %p165 = por %p163, %p164
      %p166 = scmp.ne.s32.totalorder %s155, %s156
      %p167 = scmp.eq.s32.totalorder %s23, 0
      %p168 = por %p166, %p167
      %p169 = scmp.ne.s32.totalorder %s155, %s156
      %p170 = scmp.eq.s32.totalorder %s24, 1
      %p171 = por %p169, %p170
      %p173 = scmp.ne.s32.totalorder %s156, %s172
      %p174 = scmp.eq.s32.totalorder %s24, 0
      %p175 = por %p173, %p174
      %p176 = scmp.le.s32.totalorder 1, %s18
      %p177 = scmp.lt.s32.totalorder %s18, 3
      %p178 = pnand %p176, %p177
      %p179 = pneg %p178
      // Predicated region
      $region9: #{tpu_custom_call.1} parent=5 // pred_check
        _
      $region10: #{tpu_custom_call.1} parent=5 // pred_check_branch
        %181 = sbr.rel (%p178) target = $region12
      $region11: #{tpu_custom_call.1} parent=5 // pred_region
        %s182 = ssub.s32 %s18, 1
        // Predicated region
        $region13: #{tpu_custom_call.1} parent=11 // pred_check
          %p183 = pneg %p79
        $region14: #{tpu_custom_call.1} parent=11 // pred_check_branch
          %185 = sbr.rel (%p183) target = $region16
        $region15: #{tpu_custom_call.1} parent=11 // pred_region
          %s187 = ssub.s32 2048, 2048
          %188 = vsyncadd [#allocation7], %s187
          %s189 = sshll.u32 [#allocation6], 4
          %s190 = int_to_ptr.vmem [resolvable:$true] %s189
          %195 = dma.hbm_to_vmem [thread:$0]  %s1, 2048, %s190, [#allocation7], 128, 128, 8
        $region16: #{tpu_custom_call.1} parent=11 // pred_fallthru
          _
        // Predicated region
        $region17: #{tpu_custom_call.1} parent=11 // pred_check
          %p196 = pneg %p100
        $region18: #{tpu_custom_call.1} parent=11 // pred_check_branch
          %198 = sbr.rel (%p196) target = $region20
        $region19: #{tpu_custom_call.1} parent=11 // pred_region
          _
        $region20: #{tpu_custom_call.1} parent=11 // pred_fallthru
          _
        // Predicated region
        $region21: #{tpu_custom_call.1} parent=11 // pred_check
          %p199 = pneg %p121
        $region22: #{tpu_custom_call.1} parent=11 // pred_check_branch
          %201 = sbr.rel (%p199) target = $region24
        $region23: #{tpu_custom_call.1} parent=11 // pred_region
          %s203 = ssub.s32 2048, 2048
          %204 = vsyncadd [#allocation7], %s203
          %s205 = sshll.u32 [#allocation8], 4
          %s206 = int_to_ptr.vmem [resolvable:$true] %s205
          %211 = dma.hbm_to_vmem [thread:$0]  %s3, 2048, %s206, [#allocation7], 64, 64, 4
        $region24: #{tpu_custom_call.1} parent=11 // pred_fallthru
          _
        // Predicated region
        $region25: #{tpu_custom_call.1} parent=11 // pred_check
          %p212 = pneg %p142
        $region26: #{tpu_custom_call.1} parent=11 // pred_check_branch
          %214 = sbr.rel (%p212) target = $region28
        $region27: #{tpu_custom_call.1} parent=11 // pred_region
          _
        $region28: #{tpu_custom_call.1} parent=11 // pred_fallthru
          _
      $region12: #{tpu_custom_call.1} parent=5 // pred_fallthru
        _
      %p215 = scmp.lt.s32.totalorder %s18, 2
      // Predicated region
      $region29: #{tpu_custom_call.1} parent=5 // pred_check
        %p216 = pneg %p215
      $region30: #{tpu_custom_call.1} parent=5 // pred_check_branch
        %218 = sbr.rel (%p216) target = $region32
      $region31: #{tpu_custom_call.1} parent=5 // pred_region
        // Predicated region
        $region33: #{tpu_custom_call.1} parent=31 // pred_check
          %p219 = pneg %p52
        $region34: #{tpu_custom_call.1} parent=31 // pred_check_branch
          %221 = sbr.rel (%p219) target = $region36
        $region35: #{tpu_custom_call.1} parent=31 // pred_region
          %s222 = sand.u32 %s42, 1
          %s223 = scalar_lea.sflag [#allocation4], %s222
          %s224 = sand.u32 %s42, 1
          %s225 = smul.addr %s224, 128
          %s226 = scalar_lea.vmem [#allocation3], %s225
          %s227 = smul.u32 8, %s25
          %s228 = smul.u32 2, %s26
          %s230 = ssub.s32 2048, 2048
          %231 = vsyncadd %s223, %s230
          %s232 = smul.addr %s227, 2
          %s233 = sadd.s32 %s228, %s232
          %s234 = smul.addr %s233, 128
          %s235 = scalar_lea.hbm %s0, %s234
          %s236 = sshll.u32 %s226, 4
          %s237 = int_to_ptr.vmem [resolvable:$true] %s236
          %242 = dma.hbm_to_vmem [thread:$0]  %s235, 2048, %s237, %s223, 128, 128, 8
        $region36: #{tpu_custom_call.1} parent=31 // pred_fallthru
          _
      $region32: #{tpu_custom_call.1} parent=5 // pred_fallthru
        _
      %p243 = scmp.le.s32.totalorder 1, %s18
      %p244 = scmp.lt.s32.totalorder %s18, 3
      %p245 = pnand %p243, %p244
      %p246 = pneg %p245
      // Predicated region
      $region37: #{tpu_custom_call.1} parent=5 // pred_check
        _
      $region38: #{tpu_custom_call.1} parent=5 // pred_check_branch
        %248 = sbr.rel (%p245) target = $region40
      $region39: #{tpu_custom_call.1} parent=5 // pred_region
        %s249 = ssub.s32 %s18, 1
        %s250 = sand.u32 %s45, 1
        %s251 = scalar_lea.sflag [#allocation4], %s250
        %s252 = sand.u32 %s45, 1
        %s253 = smul.addr %s252, 128
        %s254 = scalar_lea.vmem [#allocation3], %s253
        // Predicated region
        $region41: #{tpu_custom_call.1} parent=39 // pred_check
          %p255 = pneg %p58
        $region42: #{tpu_custom_call.1} parent=39 // pred_check_branch
          %257 = sbr.rel (%p255) target = $region44
        $region43: #{tpu_custom_call.1} parent=39 // pred_region
          %258 = dma.done %s251, 2048
        $region44: #{tpu_custom_call.1} parent=39 // pred_fallthru
          _
        // Predicated region
        $region45: #{tpu_custom_call.1} parent=39 // pred_check
          %p259 = pneg %p79
        $region46: #{tpu_custom_call.1} parent=39 // pred_check_branch
          %261 = sbr.rel (%p259) target = $region48
        $region47: #{tpu_custom_call.1} parent=39 // pred_region
          %262 = dma.done [#allocation7], 2048
        $region48: #{tpu_custom_call.1} parent=39 // pred_fallthru
          _
        // Predicated region
        $region49: #{tpu_custom_call.1} parent=39 // pred_check
          %p263 = pneg %p121
        $region50: #{tpu_custom_call.1} parent=39 // pred_check_branch
          %265 = sbr.rel (%p263) target = $region52
        $region51: #{tpu_custom_call.1} parent=39 // pred_region
          %266 = dma.done [#allocation7], 2048
        $region52: #{tpu_custom_call.1} parent=39 // pred_fallthru
          _
        %s267 = sand.u32 %s45, 1
        %s268 = scalar_lea.sflag [#allocation4], %s267
        %s269 = sand.u32 %s45, 1
        %s270 = smul.addr %s269, 128
        %s271 = scalar_lea.vmem [#allocation3], %s270
        %p272 = pneg %p58
        %p273 = pneg %p55
        %p274 = pneg %p79
        %p275 = pneg %p76
        %p276 = pneg %p100
        %p277 = pneg %p97
        %p278 = pneg %p121
        %p279 = pneg %p118
        %p280 = pneg %p142
        %p281 = pneg %p139
        %p282 = pneg %p168
        %p283 = pneg %p165
        %s284 = sand.u32 %s155, 1
        %s285 = scalar_lea.sflag [#allocation5], %s284
        %s286 = sand.u32 %s155, 1
        %s287 = smul.addr %s286, 8
        %s288 = scalar_lea.vmem [#allocation9], %s287
        %s289 = smul.u32 8, %s27
        %s290 = smul.u32 2, %s28
        %p292 = scmp.eq.s32.totalorder %s28, 0
        // Predicated region
        $region53: #{tpu_custom_call.1} parent=39 // pred_check
          %p293 = pneg %p292
        $region54: #{tpu_custom_call.1} parent=39 // pred_check_branch
          %295 = sbr.rel (%p293) target = $region56
        $region55: #{tpu_custom_call.1} parent=39 // pred_region
          %296 = vst [vmem:[#allocation2] sm:$0xff] 0.0
        $region56: #{tpu_custom_call.1} parent=39 // pred_fallthru
          _
        %v297 = vld [vmem:[#allocation2] sm:$0xff]
        %v298 = vld [vmem:[%s254] sm:$0xff]
        %v299 = vld [vmem:[%s254 + $0x8] sm:$0xff]
        %v300 = vld [vmem:[%s254 + $0x10] sm:$0xff]
        %v301 = vld [vmem:[%s254 + $0x18] sm:$0xff]
        %v302 = vld [vmem:[%s254 + $0x20] sm:$0xff]
        %v303 = vld [vmem:[%s254 + $0x28] sm:$0xff]
        %v304 = vld [vmem:[%s254 + $0x30] sm:$0xff]
        %v305 = vld [vmem:[%s254 + $0x38] sm:$0xff]
        %v306 = vld [vmem:[%s254 + $0x40] sm:$0xff]
        %v307 = vld [vmem:[%s254 + $0x48] sm:$0xff]
        %v308 = vld [vmem:[%s254 + $0x50] sm:$0xff]
        %v309 = vld [vmem:[%s254 + $0x58] sm:$0xff]
        %v310 = vld [vmem:[%s254 + $0x60] sm:$0xff]
        %v311 = vld [vmem:[%s254 + $0x68] sm:$0xff]
        %v312 = vld [vmem:[%s254 + $0x70] sm:$0xff]
        %v313 = vld [vmem:[%s254 + $0x78] sm:$0xff]
        %v314 = vadd.f32 %v298, %v299
        %v315 = vrot.slane %v314, 4
        %v316 = vadd.f32 %v314, %v315
        %v317 = vrot.slane %v316, 2
        %v318 = vadd.f32 %v316, %v317
        %v319 = vrot.slane %v318, 1
        %v320 = vadd.f32 %v318, %v319
        %v321 = vadd.f32 %v300, %v301
        %v322 = vrot.slane %v321, 4
        %v323 = vadd.f32 %v321, %v322
        %v324 = vrot.slane %v323, 2
        %v325 = vadd.f32 %v323, %v324
        %v326 = vrot.slane %v325, 1
        %v327 = vadd.f32 %v325, %v326
        %v328 = vadd.f32 %v302, %v303
        %v329 = vrot.slane %v328, 4
        %v330 = vadd.f32 %v328, %v329
        %v331 = vrot.slane %v330, 2
        %v332 = vadd.f32 %v330, %v331
        %v333 = vrot.slane %v332, 1
        %v334 = vadd.f32 %v332, %v333
        %v335 = vadd.f32 %v304, %v305
        %v336 = vrot.slane %v335, 4
        %v337 = vadd.f32 %v335, %v336
        %v338 = vrot.slane %v337, 2
        %v339 = vadd.f32 %v337, %v338
        %v340 = vrot.slane %v339, 1
        %v341 = vadd.f32 %v339, %v340
        %v342 = vadd.f32 %v306, %v307
        %v343 = vrot.slane %v342, 4
        %v344 = vadd.f32 %v342, %v343
        %v345 = vrot.slane %v344, 2
        %v346 = vadd.f32 %v344, %v345
        %v347 = vrot.slane %v346, 1
        %v348 = vadd.f32 %v346, %v347
        %v349 = vadd.f32 %v308, %v309
        %v350 = vrot.slane %v349, 4
        %v351 = vadd.f32 %v349, %v350
        %v352 = vrot.slane %v351, 2
        %v353 = vadd.f32 %v351, %v352
        %v354 = vrot.slane %v353, 1
        %v355 = vadd.f32 %v353, %v354
        %v356 = vadd.f32 %v310, %v311
        %v357 = vrot.slane %v356, 4
        %v358 = vadd.f32 %v356, %v357
        %v359 = vrot.slane %v358, 2
        %v360 = vadd.f32 %v358, %v359
        %v361 = vrot.slane %v360, 1
        %v362 = vadd.f32 %v360, %v361
        %v363 = vadd.f32 %v312, %v313
        %v364 = vrot.slane %v363, 4
        %v365 = vadd.f32 %v363, %v364
        %v366 = vrot.slane %v365, 2
        %v367 = vadd.f32 %v365, %v366
        %v368 = vrot.slane %v367, 1
        %v369 = vadd.f32 %v367, %v368
        %vm378 = vcmask 1041409
        %v379 = vsel %vm378, %v327, %v320
        %vm380 = vcmask 1042434
        %v381 = vsel %vm380, %v334, %v379
        %vm382 = vcmask 1043459
        %v383 = vsel %vm382, %v341, %v381
        %vm384 = vcmask 1044484
        %v385 = vsel %vm384, %v348, %v383
        %vm386 = vcmask 1045509
        %v387 = vsel %vm386, %v355, %v385
        %vm388 = vcmask 1046534
        %v389 = vsel %vm388, %v362, %v387
        %vm390 = vcmask 1047559
        %v391 = vsel %vm390, %v369, %v389
        %v393 = vadd.f32 %v297, %v391
        %394 = vst [vmem:[#allocation2] sm:$0xff] %v393
        // Predicated region
        $region57: #{tpu_custom_call.1} parent=39 // pred_check
          %p395 = pneg %p292
        $region58: #{tpu_custom_call.1} parent=39 // pred_check_branch
          %397 = sbr.rel (%p395) target = $region60
        $region59: #{tpu_custom_call.1} parent=39 // pred_region
          %v398 = vld [vmem:[#allocation2] sm:$0xff]
          %v399 = vmul.f32 %v398, 0.0625
          %v400 = vpack.c.bf16 %v399, %v399
          %v401 = vld [vmem:[#allocation6] sm:$0xff]
          %v402 = vld [vmem:[#allocation6 + $0x8] sm:$0xff]
          %v403 = vld [vmem:[#allocation6 + $0x10] sm:$0xff]
          %v404 = vld [vmem:[#allocation6 + $0x18] sm:$0xff]
          %v405 = vld [vmem:[#allocation6 + $0x20] sm:$0xff]
          %v406 = vld [vmem:[#allocation6 + $0x28] sm:$0xff]
          %v407 = vld [vmem:[#allocation6 + $0x30] sm:$0xff]
          %v408 = vld [vmem:[#allocation6 + $0x38] sm:$0xff]
          %v409 = vld [vmem:[#allocation6 + $0x40] sm:$0xff]
          %v410 = vld [vmem:[#allocation6 + $0x48] sm:$0xff]
          %v411 = vld [vmem:[#allocation6 + $0x50] sm:$0xff]
          %v412 = vld [vmem:[#allocation6 + $0x58] sm:$0xff]
          %v413 = vld [vmem:[#allocation6 + $0x60] sm:$0xff]
          %v414 = vld [vmem:[#allocation6 + $0x68] sm:$0xff]
          %v415 = vld [vmem:[#allocation6 + $0x70] sm:$0xff]
          %v416 = vld [vmem:[#allocation6 + $0x78] sm:$0xff]
          %v417 = vld [vmem:[%s2] sm:$0x3]
          %v419 = vlaneseq
          %v420 = vshrl.u32 %v419, 7
          %v421 = vsub.s32 0, %v420
          %v422 = vrot.slane %v417, %v421
          %v423 = vlaneseq
          %v424 = vshrl.u32 %v423, 7
          %v425 = vsub.s32 1, %v424
          %v426 = vrot.slane %v417, %v425
          %v445 = vunpack.c.l.b16 %v401
          %v446 = vunpack.c.h.b16 %v401
          %v447 = vunpack.c.l.b16 %v402
          %v448 = vunpack.c.h.b16 %v402
          %v449 = vunpack.c.l.b16 %v403
          %v450 = vunpack.c.h.b16 %v403
          %v451 = vunpack.c.l.b16 %v404
          %v452 = vunpack.c.h.b16 %v404
          %v453 = vunpack.c.l.b16 %v405
          %v454 = vunpack.c.h.b16 %v405
          %v455 = vunpack.c.l.b16 %v406
          %v456 = vunpack.c.h.b16 %v406
          %v457 = vunpack.c.l.b16 %v407
          %v458 = vunpack.c.h.b16 %v407
          %v459 = vunpack.c.l.b16 %v408
          %v460 = vunpack.c.h.b16 %v408
          %v461 = vunpack.c.l.b16 %v409
          %v462 = vunpack.c.h.b16 %v409
          %v463 = vunpack.c.l.b16 %v410
          %v464 = vunpack.c.h.b16 %v410
          %v465 = vunpack.c.l.b16 %v411
          %v466 = vunpack.c.h.b16 %v411
          %v467 = vunpack.c.l.b16 %v412
          %v468 = vunpack.c.h.b16 %v412
          %v469 = vunpack.c.l.b16 %v413
          %v470 = vunpack.c.h.b16 %v413
          %v471 = vunpack.c.l.b16 %v414
          %v472 = vunpack.c.h.b16 %v414
          %v473 = vunpack.c.l.b16 %v415
          %v474 = vunpack.c.h.b16 %v415
          %v475 = vunpack.c.l.b16 %v416
          %v476 = vunpack.c.h.b16 %v416
          %v477 = vpack.c.b16 %v447, %v445
          %v478 = vpack.c.b16 %v448, %v446
          %v479 = vpack.c.b16 %v451, %v449
          %v480 = vpack.c.b16 %v452, %v450
          %v481 = vpack.c.b16 %v455, %v453
          %v482 = vpack.c.b16 %v456, %v454
          %v483 = vpack.c.b16 %v459, %v457
          %v484 = vpack.c.b16 %v460, %v458
          %v485 = vpack.c.b16 %v463, %v461
          %v486 = vpack.c.b16 %v464, %v462
          %v487 = vpack.c.b16 %v467, %v465
          %v488 = vpack.c.b16 %v468, %v466
          %v489 = vpack.c.b16 %v471, %v469
          %v490 = vpack.c.b16 %v472, %v470
          %v491 = vpack.c.b16 %v475, %v473
          %v492 = vpack.c.b16 %v476, %v474
          %509 = vmatprep.subr.bf16.mxu0 %v478
          %510 = vmatpush1.bf16.msra.mxu0 %v477
          %511 = vmatprep.subr.bf16.mxu0 %v480
          %512 = vmatpush1.bf16.msra.mxu0 %v479
          %513 = vmatprep.subr.bf16.mxu0 %v482
          %514 = vmatpush1.bf16.msra.mxu0 %v481
          %515 = vmatprep.subr.bf16.mxu0 %v484
          %516 = vmatpush1.bf16.msra.mxu0 %v483
          %517 = vmatprep.subr.bf16.mxu0 %v486
          %518 = vmatpush1.bf16.msra.mxu0 %v485
          %519 = vmatprep.subr.bf16.mxu0 %v488
          %520 = vmatpush1.bf16.msra.mxu0 %v487
          %521 = vmatprep.subr.bf16.mxu0 %v490
          %522 = vmatpush1.bf16.msra.mxu0 %v489
          %523 = vmatprep.subr.bf16.mxu0 %v492
          %524 = vmatpush1.bf16.msra.mxu0 %v491
          %525 = vmatprep.subr.bf16.mxu0 0
          %526 = vmatpush1.bf16.msra.mxu0 0
          %527 = vmatprep.subr.bf16.mxu0 0
          %528 = vmatpush1.bf16.msra.mxu0 0
          %529 = vmatprep.subr.bf16.mxu0 0
          %530 = vmatpush1.bf16.msra.mxu0 0
          %531 = vmatprep.subr.bf16.mxu0 0
          %532 = vmatpush1.bf16.msra.mxu0 0
          %533 = vmatprep.subr.bf16.mxu0 0
          %534 = vmatpush1.bf16.msra.mxu0 0
          %535 = vmatprep.subr.bf16.mxu0 0
          %536 = vmatpush1.bf16.msra.mxu0 0
          %537 = vmatprep.subr.bf16.mxu0 0
          %538 = vmatpush1.bf16.msra.mxu0 0
          %539 = vmatprep.subr.bf16.mxu0 0
          %540 = vmatpush1.bf16.msra.mxu0 0
          %541 = vmatprep.mubr.bf16.mxu0 0
          %542 = vmatmul.mubr.bf16.gmra.mrb[0].mxu0 %v400
          %v543 = vpop.f32.mrb[0].mxu0
          %v544 = vadd.f32 %v422, %v543
          %v545 = vpop.f32.mrb[0].mxu0
          %v546 = vadd.f32 %v426, %v545
          %v547 = vpop.f32.mrb[0].mxu0
          %v548 = vpop.f32.mrb[0].mxu0
          %549 = vdwg.mxu0
          %v550 = vpack.c.bf16 %v544, %v544
          %v551 = vpack.c.bf16 %v546, %v546
          %v552 = vld [vmem:[#allocation8] sm:$0xf]
          %v553 = vld [vmem:[#allocation8 + $0x4] sm:$0xf]
          %v554 = vld [vmem:[#allocation8 + $0x8] sm:$0xf]
          %v555 = vld [vmem:[#allocation8 + $0xc] sm:$0xf]
          %v556 = vld [vmem:[#allocation8 + $0x10] sm:$0xf]
          %v557 = vld [vmem:[#allocation8 + $0x14] sm:$0xf]
          %v558 = vld [vmem:[#allocation8 + $0x18] sm:$0xf]
          %v559 = vld [vmem:[#allocation8 + $0x1c] sm:$0xf]
          %v560 = vld [vmem:[#allocation8 + $0x20] sm:$0xf]
          %v561 = vld [vmem:[#allocation8 + $0x24] sm:$0xf]
          %v562 = vld [vmem:[#allocation8 + $0x28] sm:$0xf]
          %v563 = vld [vmem:[#allocation8 + $0x2c] sm:$0xf]
          %v564 = vld [vmem:[#allocation8 + $0x30] sm:$0xf]
          %v565 = vld [vmem:[#allocation8 + $0x34] sm:$0xf]
          %v566 = vld [vmem:[#allocation8 + $0x38] sm:$0xf]
          %v567 = vld [vmem:[#allocation8 + $0x3c] sm:$0xf]
          %v568 = vld [vmem:[#allocation8 + $0x40] sm:$0xf]
          %v569 = vld [vmem:[#allocation8 + $0x44] sm:$0xf]
          %v570 = vld [vmem:[#allocation8 + $0x48] sm:$0xf]
          %v571 = vld [vmem:[#allocation8 + $0x4c] sm:$0xf]
          %v572 = vld [vmem:[#allocation8 + $0x50] sm:$0xf]
          %v573 = vld [vmem:[#allocation8 + $0x54] sm:$0xf]
          %v574 = vld [vmem:[#allocation8 + $0x58] sm:$0xf]
          %v575 = vld [vmem:[#allocation8 + $0x5c] sm:$0xf]
          %v576 = vld [vmem:[#allocation8 + $0x60] sm:$0xf]
          %v577 = vld [vmem:[#allocation8 + $0x64] sm:$0xf]
          %v578 = vld [vmem:[#allocation8 + $0x68] sm:$0xf]
          %v579 = vld [vmem:[#allocation8 + $0x6c] sm:$0xf]
          %v580 = vld [vmem:[#allocation8 + $0x70] sm:$0xf]
          %v581 = vld [vmem:[#allocation8 + $0x74] sm:$0xf]
          %v582 = vld [vmem:[#allocation8 + $0x78] sm:$0xf]
          %v583 = vld [vmem:[#allocation8 + $0x7c] sm:$0xf]
          %v584 = vld [vmem:[%s4] sm:$0x1]
          %v586 = vlaneseq
          %v587 = vshrl.u32 %v586, 7
          %v588 = vsub.s32 0, %v587
          %v589 = vrot.slane %v584, %v588
          %v623 = vunpack.c.l.b16 %v552
          %v624 = vunpack.c.l.b16 %v553
          %v625 = vunpack.c.l.b16 %v554
          %v626 = vunpack.c.l.b16 %v555
          %v627 = vunpack.c.l.b16 %v556
          %v628 = vunpack.c.l.b16 %v557
          %v629 = vunpack.c.l.b16 %v558
          %v630 = vunpack.c.l.b16 %v559
          %v631 = vunpack.c.l.b16 %v560
          %v632 = vunpack.c.l.b16 %v561
          %v633 = vunpack.c.l.b16 %v562
          %v634 = vunpack.c.l.b16 %v563
          %v635 = vunpack.c.l.b16 %v564
          %v636 = vunpack.c.l.b16 %v565
          %v637 = vunpack.c.l.b16 %v566
          %v638 = vunpack.c.l.b16 %v567
          %v639 = vunpack.c.l.b16 %v568
          %v640 = vunpack.c.l.b16 %v569
          %v641 = vunpack.c.l.b16 %v570
          %v642 = vunpack.c.l.b16 %v571
          %v643 = vunpack.c.l.b16 %v572
          %v644 = vunpack.c.l.b16 %v573
          %v645 = vunpack.c.l.b16 %v574
          %v646 = vunpack.c.l.b16 %v575
          %v647 = vunpack.c.l.b16 %v576
          %v648 = vunpack.c.l.b16 %v577
          %v649 = vunpack.c.l.b16 %v578
          %v650 = vunpack.c.l.b16 %v579
          %v651 = vunpack.c.l.b16 %v580
          %v652 = vunpack.c.l.b16 %v581
          %v653 = vunpack.c.l.b16 %v582
          %v654 = vunpack.c.l.b16 %v583
          %v655 = vpack.c.b16 %v624, %v623
          %v656 = vpack.c.b16 %v626, %v625
          %v657 = vpack.c.b16 %v628, %v627
          %v658 = vpack.c.b16 %v630, %v629
          %v659 = vpack.c.b16 %v632, %v631
          %v660 = vpack.c.b16 %v634, %v633
          %v661 = vpack.c.b16 %v636, %v635
          %v662 = vpack.c.b16 %v638, %v637
          %v663 = vpack.c.b16 %v640, %v639
          %v664 = vpack.c.b16 %v642, %v641
          %v665 = vpack.c.b16 %v644, %v643
          %v666 = vpack.c.b16 %v646, %v645
          %v667 = vpack.c.b16 %v648, %v647
          %v668 = vpack.c.b16 %v650, %v649
          %v669 = vpack.c.b16 %v652, %v651
          %v670 = vpack.c.b16 %v654, %v653
          %687 = vmatprep.subr.bf16.mxu0 0
          %688 = vmatpush1.bf16.msra.mxu0 %v655
          %689 = vmatprep.subr.bf16.mxu0 0
          %690 = vmatpush1.bf16.msra.mxu0 %v656
          %691 = vmatprep.subr.bf16.mxu0 0
          %692 = vmatpush1.bf16.msra.mxu0 %v657
          %693 = vmatprep.subr.bf16.mxu0 0
          %694 = vmatpush1.bf16.msra.mxu0 %v658
          %695 = vmatprep.subr.bf16.mxu0 0
          %696 = vmatpush1.bf16.msra.mxu0 %v659
          %697 = vmatprep.subr.bf16.mxu0 0
          %698 = vmatpush1.bf16.msra.mxu0 %v660
          %699 = vmatprep.subr.bf16.mxu0 0
          %700 = vmatpush1.bf16.msra.mxu0 %v661
          %701 = vmatprep.subr.bf16.mxu0 0
          %702 = vmatpush1.bf16.msra.mxu0 %v662
          %703 = vmatprep.subr.bf16.mxu0 0
          %704 = vmatpush1.bf16.msra.mxu0 %v663
          %705 = vmatprep.subr.bf16.mxu0 0
          %706 = vmatpush1.bf16.msra.mxu0 %v664
          %707 = vmatprep.subr.bf16.mxu0 0
          %708 = vmatpush1.bf16.msra.mxu0 %v665
          %709 = vmatprep.subr.bf16.mxu0 0
          %710 = vmatpush1.bf16.msra.mxu0 %v666
          %711 = vmatprep.subr.bf16.mxu0 0
          %712 = vmatpush1.bf16.msra.mxu0 %v667
          %713 = vmatprep.subr.bf16.mxu0 0
          %714 = vmatpush1.bf16.msra.mxu0 %v668
          %715 = vmatprep.subr.bf16.mxu0 0
          %716 = vmatpush1.bf16.msra.mxu0 %v669
          %717 = vmatprep.subr.bf16.mxu0 0
          %718 = vmatpush1.bf16.msra.mxu0 %v670
          %719 = vmatprep.mubr.bf16.mxu0 %v551
          %720 = vmatmul.mubr.bf16.gmra.mrb[0].mxu0 %v550
          %v721 = vpop.f32.mrb[0].mxu0
          %v722 = vadd.f32 %v589, %v721
          %v723 = vpop.f32.mrb[0].mxu0
          %v724 = vpop.f32.mrb[0].mxu0
          %v725 = vpop.f32.mrb[0].mxu0
          %726 = vdwg.mxu0
          %727 = vst [vmem:[%s288] sm:$0xff] %v722
        $region60: #{tpu_custom_call.1} parent=39 // pred_fallthru
          _
        %s728 = sand.u32 %s155, 1
        %s729 = scalar_lea.sflag [#allocation5], %s728
        %s730 = sand.u32 %s155, 1
        %s731 = smul.addr %s730, 8
        %s732 = scalar_lea.vmem [#allocation9], %s731
        // Predicated region
        $region61: #{tpu_custom_call.1} parent=39 // pred_check
          %p733 = pneg %p165
        $region62: #{tpu_custom_call.1} parent=39 // pred_check_branch
          %735 = sbr.rel (%p733) target = $region64
        $region63: #{tpu_custom_call.1} parent=39 // pred_region
          %s737 = ssub.s32 128, 128
          %738 = vsyncadd %s729, %s737
          %s739 = smul.addr %s27, 128
          %s740 = scalar_lea.hbm %s5, %s739
          %s742 = sshll.u32 %s732, 4
          %s743 = int_to_ptr.vmem [resolvable:$true] %s742
          %745 = dma.vmem_to_hbm [thread:$0]  %s743, 128, %s740, %s729
        $region64: #{tpu_custom_call.1} parent=39 // pred_fallthru
          _
      $region40: #{tpu_custom_call.1} parent=5 // pred_fallthru
        _
      %p746 = scmp.le.s32.totalorder 2, %s18
      // Predicated region
      $region65: #{tpu_custom_call.1} parent=5 // pred_check
        %p747 = pneg %p746
      $region66: #{tpu_custom_call.1} parent=5 // pred_check_branch
        %749 = sbr.rel (%p747) target = $region68
      $region67: #{tpu_custom_call.1} parent=5 // pred_region
        %s750 = ssub.s32 %s18, 2
        // Predicated region
        $region69: #{tpu_custom_call.1} parent=67 // pred_check
          %p751 = pneg %p171
        $region70: #{tpu_custom_call.1} parent=67 // pred_check_branch
          %753 = sbr.rel (%p751) target = $region72
        $region71: #{tpu_custom_call.1} parent=67 // pred_region
          %s754 = sand.u32 %s156, 1
          %s755 = scalar_lea.sflag [#allocation5], %s754
          %s756 = sand.u32 %s156, 1
          %s757 = smul.addr %s756, 8
          %s758 = scalar_lea.vmem [#allocation9], %s757
          %759 = dma.done %s755, 128
        $region72: #{tpu_custom_call.1} parent=67 // pred_fallthru
          _
      $region68: #{tpu_custom_call.1} parent=5 // pred_fallthru
        _
    $region6: #{tpu_custom_call.1} parent=1 // loop_footer
      %s22 = sadd.s32 1, %s18
    $region7: #{tpu_custom_call.1} parent=1 // loop_footer_branch
      %17 = sbr.rel target = $region3
    $region8: #{tpu_custom_call.1} parent=1 // loop_exit
      _
    %760 = vsyncpa [#allocation4], 1
    %s761 = scalar_lea.sflag [#allocation4], 1
    %762 = vsyncpa %s761, 1
    %763 = vsyncpa [#allocation7], 1
    %764 = vsyncpa [#allocation5], 1
    %s765 = scalar_lea.sflag [#allocation5], 1
    %766 = vsyncpa %s765, 1

// kernel: tpu_custom_call.1
$region0: #{tpu_custom_call.1}
  #allocation0 [shape = 'u32[]', space=smem, size = 0x4, offset = 0x4, fixed_abs, tag = 'smem constant byte address 0x4 - core index']
  #allocation1 [shape = 'u32[144,128]{1,0:T(1,128)}', space=vmem, size = 0x12000, scoped, tag = 'internal scratch']
  #allocation2 [shape = 'f32[8,128]{1,0:T(8,128)}', space=vmem, size = 0x1000, scoped, tag = 'scratch operand']
  %s0 = inlined_call_operand.hbm [shape: f32[16,16,128], index: 0, kind: input, shape index: {}]
  %s1 = inlined_call_operand.hbm [shape: bf16[128,256], index: 1, kind: input, shape index: {}]
  %s2 = inlined_call_operand.vmem [shape: f32[1,256], index: 2, kind: input, shape index: {}]
  %s3 = inlined_call_operand.hbm [shape: bf16[256,128], index: 3, kind: input, shape index: {}]
  %s4 = inlined_call_operand.vmem [shape: f32[1,128], index: 4, kind: input, shape index: {}]
  %s5 = inlined_call_operand.hbm [shape: f32[16,128], index: 5, kind: output, shape index: {}]
  %s6 = sld [smem:[#allocation0]]
  $region73: #{tpu_custom_call.1} parent=0
    _
  %s8 = ssub.s32 1, %s6
  %s9 = scalar_select 0, %s8, %s6
  $region1: #{tpu_custom_call.1} parent=0
    #allocation3 [shape = 'u8[131072]{0}', space=vmem, size = 0x20000, scoped, tag = 'input window, operand 0']
    #allocation4 [shape = 's32[2]{0}', space=sflag, size = 0x8, scoped, tag = 'scoped memory for tpu_custom_call.1']
    #allocation5 [shape = 's32[2]{0}', space=sflag, size = 0x8, scoped, tag = 'scoped memory for tpu_custom_call.1']
    #allocation6 [shape = 'u8[65536]{0}', space=vmem, size = 0x10000, scoped, tag = 'input window, operand 1, single buffered']
    #allocation7 [shape = 's32[1]{0}', space=sflag, size = 0x4, scoped, tag = 'scoped memory for tpu_custom_call.1']
    #allocation8 [shape = 'u8[65536]{0}', space=vmem, size = 0x10000, scoped, tag = 'input window, operand 3, single buffered']
    #allocation9 [shape = 'u8[8192]{0}', space=vmem, size = 0x2000, scoped, tag = 'output window, operand 0']
    %10 = vsyncpa [#allocation4], 0
    %s11 = scalar_lea.sflag [#allocation4], 1
    %12 = vsyncpa %s11, 0
    %13 = vsyncpa [#allocation7], 0
    %14 = vsyncpa [#allocation5], 0
    %s15 = scalar_lea.sflag [#allocation5], 1
    %16 = vsyncpa %s15, 0
    loop: start=0, step=1, limit=4
    $region2: #{tpu_custom_call.1} parent=1 // loop_pre_header
      _
    $region3: #{tpu_custom_call.1} parent=1 // loop_header
      %s18 = sphi 0, %s22
      %p19 = scmp.ge.s32.totalorder %s18, 4
      %s25 = sphi 0, %s37
      %s26 = sphi 0, %s33
      %s27 = sphi 0, %s25
      %s28 = sphi 0, %s26
      %s29 = sphi 0, %s27
      %s30 = sphi 0, %s28
      %s42 = sphi 0, %s44
      %s45 = sphi 0, %s42
      %s46 = sphi 0, %s45
      %s62 = sphi 0, %s46
      %s66 = sphi 0, %s66
      %s68 = sphi 0, %s66
      %s69 = sphi 0, %s68
      %s83 = sphi 0, %s69
      %s87 = sphi 0, %s87
      %s89 = sphi 0, %s87
      %s90 = sphi 0, %s89
      %s104 = sphi 0, %s90
      %s108 = sphi 0, %s108
      %s110 = sphi 0, %s108
      %s111 = sphi 0, %s110
      %s125 = sphi 0, %s111
      %s129 = sphi 0, %s129
      %s131 = sphi 0, %s129
      %s132 = sphi 0, %s131
      %s146 = sphi 0, %s132
      %s152 = sphi 0, %s154
      %s155 = sphi 0, %s152
      %s156 = sphi 0, %s155
      %s172 = sphi 0, %s156
    $region4: #{tpu_custom_call.1} parent=1 // loop_header_branch
      %21 = sbr.rel (%p19) target = $region8
    $region5: #{tpu_custom_call.1} parent=1 // loop_body
      %s23 = ssub.s32 %s18, 1
      %s24 = ssub.s32 %s18, 2
      %s31 = sadd.s32 1, %s26
      %p32 = scmp.ge.s32.totalorder %s31, 1
      %s33 = scalar_select %p32, 0, %s31
      %s34 = sadd.s32 1, %s25
      %s35 = scalar_select %p32, %s34, %s25
      %p36 = scmp.ge.s32.totalorder %s35, 2
      %s37 = scalar_select %p36, 0, %s35
      %s38 = ssub.s32 %s25, %s37
      %s39 = ssub.s32 %s26, %s33
      %s40 = sor.u32 %s38, %s39
      %p41 = scmp.eq.s32.totalorder %s40, 0
      %s43 = sadd.s32 %s42, 1
      %s44 = scalar_select %p41, %s42, %s43
      %p47 = pneg %p41
      %p48 = scmp.eq.s32.totalorder %s18, 1
      %p49 = por %p47, %p48
      %p50 = scmp.ne.s32.totalorder %s42, %s45
      %p51 = scmp.eq.s32.totalorder %s18, 0
      %p52 = por %p50, %p51
      %p53 = scmp.ne.s32.totalorder %s42, %s45
      %p54 = scmp.eq.s32.totalorder %s23, 1
      %p55 = por %p53, %p54
      %p56 = scmp.ne.s32.totalorder %s45, %s46
      %p57 = scmp.eq.s32.totalorder %s23, 0
      %p58 = por %p56, %p57
      %p59 = scmp.ne.s32.totalorder %s45, %s46
      %p60 = scmp.eq.s32.totalorder %s24, 1
      %p61 = por %p59, %p60
      %p63 = scmp.ne.s32.totalorder %s46, %s62
      %p64 = scmp.eq.s32.totalorder %s24, 0
      %p65 = por %p63, %p64
      %s67 = sadd.s32 %s66, 1
      %p70 = scmp.eq.s32.totalorder %s18, 1
      %p71 = scmp.ne.s32.totalorder %s66, %s68
      %p72 = scmp.eq.s32.totalorder %s18, 0
      %p73 = por %p71, %p72
      %p74 = scmp.ne.s32.totalorder %s66, %s68
      %p75 = scmp.eq.s32.totalorder %s23, 1
      %p76 = por %p74, %p75
      %p77 = scmp.ne.s32.totalorder %s68, %s69
      %p78 = scmp.eq.s32.totalorder %s23, 0
      %p79 = por %p77, %p78
      %p80 = scmp.ne.s32.totalorder %s68, %s69
      %p81 = scmp.eq.s32.totalorder %s24, 1
      %p82 = por %p80, %p81
      %p84 = scmp.ne.s32.totalorder %s69, %s83
      %p85 = scmp.eq.s32.totalorder %s24, 0
      %p86 = por %p84, %p85
      %s88 = sadd.s32 %s87, 1
      %p91 = scmp.eq.s32.totalorder %s18, 1
      %p92 = scmp.ne.s32.totalorder %s87, %s89
      %p93 = scmp.eq.s32.totalorder %s18, 0
      %p94 = por %p92, %p93
      %p95 = scmp.ne.s32.totalorder %s87, %s89
      %p96 = scmp.eq.s32.totalorder %s23, 1
      %p97 = por %p95, %p96
      %p98 = scmp.ne.s32.totalorder %s89, %s90
      %p99 = scmp.eq.s32.totalorder %s23, 0
      %p100 = por %p98, %p99
      %p101 = scmp.ne.s32.totalorder %s89, %s90
      %p102 = scmp.eq.s32.totalorder %s24, 1
      %p103 = por %p101, %p102
      %p105 = scmp.ne.s32.totalorder %s90, %s104
      %p106 = scmp.eq.s32.totalorder %s24, 0
      %p107 = por %p105, %p106
      %s109 = sadd.s32 %s108, 1
      %p112 = scmp.eq.s32.totalorder %s18, 1
      %p113 = scmp.ne.s32.totalorder %s108, %s110
      %p114 = scmp.eq.s32.totalorder %s18, 0
      %p115 = por %p113, %p114
      %p116 = scmp.ne.s32.totalorder %s108, %s110
      %p117 = scmp.eq.s32.totalorder %s23, 1
      %p118 = por %p116, %p117
      %p119 = scmp.ne.s32.totalorder %s110, %s111
      %p120 = scmp.eq.s32.totalorder %s23, 0
      %p121 = por %p119, %p120
      %p122 = scmp.ne.s32.totalorder %s110, %s111
      %p123 = scmp.eq.s32.totalorder %s24, 1
      %p124 = por %p122, %p123
      %p126 = scmp.ne.s32.totalorder %s111, %s125
      %p127 = scmp.eq.s32.totalorder %s24, 0
      %p128 = por %p126, %p127
      %s130 = sadd.s32 %s129, 1
      %p133 = scmp.eq.s32.totalorder %s18, 1
      %p134 = scmp.ne.s32.totalorder %s129, %s131
      %p135 = scmp.eq.s32.totalorder %s18, 0
      %p136 = por %p134, %p135
      %p137 = scmp.ne.s32.totalorder %s129, %s131
      %p138 = scmp.eq.s32.totalorder %s23, 1
      %p139 = por %p137, %p138
      %p140 = scmp.ne.s32.totalorder %s131, %s132
      %p141 = scmp.eq.s32.totalorder %s23, 0
      %p142 = por %p140, %p141
      %p143 = scmp.ne.s32.totalorder %s131, %s132
      %p144 = scmp.eq.s32.totalorder %s24, 1
      %p145 = por %p143, %p144
      %p147 = scmp.ne.s32.totalorder %s132, %s146
      %p148 = scmp.eq.s32.totalorder %s24, 0
      %p149 = por %p147, %p148
      %s150 = ssub.s32 %s25, %s37
      %p151 = scmp.eq.s32.totalorder %s150, 0
      %s153 = sadd.s32 %s152, 1
      %s154 = scalar_select %p151, %s152, %s153
      %p157 = pneg %p151
      %p158 = scmp.eq.s32.totalorder %s18, 1
      %p159 = por %p157, %p158
      %p160 = scmp.ne.s32.totalorder %s152, %s155
      %p161 = scmp.eq.s32.totalorder %s18, 0
      %p162 = por %p160, %p161
      %p163 = scmp.ne.s32.totalorder %s152, %s155
      %p164 = scmp.eq.s32.totalorder %s23, 1
      %p165 = por %p163, %p164
      %p166 = scmp.ne.s32.totalorder %s155, %s156
      %p167 = scmp.eq.s32.totalorder %s23, 0
      %p168 = por %p166, %p167
      %p169 = scmp.ne.s32.totalorder %s155, %s156
      %p170 = scmp.eq.s32.totalorder %s24, 1
      %p171 = por %p169, %p170
      %p173 = scmp.ne.s32.totalorder %s156, %s172
      %p174 = scmp.eq.s32.totalorder %s24, 0
      %p175 = por %p173, %p174
      %p176 = scmp.le.s32.totalorder 1, %s18
      %p177 = scmp.lt.s32.totalorder %s18, 3
      %p178 = pnand %p176, %p177
      %p179 = pneg %p178
      // Predicated region
      $region9: #{tpu_custom_call.1} parent=5 // pred_check
        _
      $region10: #{tpu_custom_call.1} parent=5 // pred_check_branch
        %181 = sbr.rel (%p178) target = $region12
      $region11: #{tpu_custom_call.1} parent=5 // pred_region
        %s182 = ssub.s32 %s18, 1
        // Predicated region
        $region13: #{tpu_custom_call.1} parent=11 // pred_check
          %p183 = pneg %p79
        $region14: #{tpu_custom_call.1} parent=11 // pred_check_branch
          %185 = sbr.rel (%p183) target = $region16
        $region15: #{tpu_custom_call.1} parent=11 // pred_region
          %s187 = ssub.s32 2048, 2048
          %188 = vsyncadd [#allocation7], %s187
          %s189 = sshll.u32 [#allocation6], 4
          %s190 = int_to_ptr.vmem [resolvable:$true] %s189
          %195 = dma.hbm_to_vmem [thread:$0]  %s1, 2048, %s190, [#allocation7], 128, 128, 8
        $region16: #{tpu_custom_call.1} parent=11 // pred_fallthru
          _
        // Predicated region
        $region17: #{tpu_custom_call.1} parent=11 // pred_check
          %p196 = pneg %p100
        $region18: #{tpu_custom_call.1} parent=11 // pred_check_branch
          %198 = sbr.rel (%p196) target = $region20
        $region19: #{tpu_custom_call.1} parent=11 // pred_region
          _
        $region20: #{tpu_custom_call.1} parent=11 // pred_fallthru
          _
        // Predicated region
        $region21: #{tpu_custom_call.1} parent=11 // pred_check
          %p199 = pneg %p121
        $region22: #{tpu_custom_call.1} parent=11 // pred_check_branch
          %201 = sbr.rel (%p199) target = $region24
        $region23: #{tpu_custom_call.1} parent=11 // pred_region
          %s203 = ssub.s32 2048, 2048
          %204 = vsyncadd [#allocation7], %s203
          %s205 = sshll.u32 [#allocation8], 4
          %s206 = int_to_ptr.vmem [resolvable:$true] %s205
          %211 = dma.hbm_to_vmem [thread:$0]  %s3, 2048, %s206, [#allocation7], 64, 64, 4
        $region24: #{tpu_custom_call.1} parent=11 // pred_fallthru
          _
        // Predicated region
        $region25: #{tpu_custom_call.1} parent=11 // pred_check
          %p212 = pneg %p142
        $region26: #{tpu_custom_call.1} parent=11 // pred_check_branch
          %214 = sbr.rel (%p212) target = $region28
        $region27: #{tpu_custom_call.1} parent=11 // pred_region
          _
        $region28: #{tpu_custom_call.1} parent=11 // pred_fallthru
          _
      $region12: #{tpu_custom_call.1} parent=5 // pred_fallthru
        _
      %p215 = scmp.lt.s32.totalorder %s18, 2
      // Predicated region
      $region29: #{tpu_custom_call.1} parent=5 // pred_check
        %p216 = pneg %p215
      $region30: #{tpu_custom_call.1} parent=5 // pred_check_branch
        %218 = sbr.rel (%p216) target = $region32
      $region31: #{tpu_custom_call.1} parent=5 // pred_region
        // Predicated region
        $region33: #{tpu_custom_call.1} parent=31 // pred_check
          %p219 = pneg %p52
        $region34: #{tpu_custom_call.1} parent=31 // pred_check_branch
          %221 = sbr.rel (%p219) target = $region36
        $region35: #{tpu_custom_call.1} parent=31 // pred_region
          %s222 = sand.u32 %s42, 1
          %s223 = scalar_lea.sflag [#allocation4], %s222
          %s224 = sand.u32 %s42, 1
          %s225 = smul.addr %s224, 128
          %s226 = scalar_lea.vmem [#allocation3], %s225
          %s227 = smul.u32 8, %s25
          %s228 = smul.u32 2, %s26
          %s230 = ssub.s32 2048, 2048
          %231 = vsyncadd %s223, %s230
          %s232 = smul.addr %s227, 2
          %s233 = sadd.s32 %s228, %s232
          %s234 = smul.addr %s233, 128
          %s235 = scalar_lea.hbm %s0, %s234
          %s236 = sshll.u32 %s226, 4
          %s237 = int_to_ptr.vmem [resolvable:$true] %s236
          %242 = dma.hbm_to_vmem [thread:$0]  %s235, 2048, %s237, %s223, 128, 128, 8
        $region36: #{tpu_custom_call.1} parent=31 // pred_fallthru
          _
      $region32: #{tpu_custom_call.1} parent=5 // pred_fallthru
        _
      %p243 = scmp.le.s32.totalorder 1, %s18
      %p244 = scmp.lt.s32.totalorder %s18, 3
      %p245 = pnand %p243, %p244
      %p246 = pneg %p245
      // Predicated region
      $region37: #{tpu_custom_call.1} parent=5 // pred_check
        _
      $region38: #{tpu_custom_call.1} parent=5 // pred_check_branch
        %248 = sbr.rel (%p245) target = $region40
      $region39: #{tpu_custom_call.1} parent=5 // pred_region
        %s249 = ssub.s32 %s18, 1
        %s250 = sand.u32 %s45, 1
        %s251 = scalar_lea.sflag [#allocation4], %s250
        %s252 = sand.u32 %s45, 1
        %s253 = smul.addr %s252, 128
        %s254 = scalar_lea.vmem [#allocation3], %s253
        // Predicated region
        $region41: #{tpu_custom_call.1} parent=39 // pred_check
          %p255 = pneg %p58
        $region42: #{tpu_custom_call.1} parent=39 // pred_check_branch
          %257 = sbr.rel (%p255) target = $region44
        $region43: #{tpu_custom_call.1} parent=39 // pred_region
          %258 = dma.done %s251, 2048
        $region44: #{tpu_custom_call.1} parent=39 // pred_fallthru
          _
        // Predicated region
        $region45: #{tpu_custom_call.1} parent=39 // pred_check
          %p259 = pneg %p79
        $region46: #{tpu_custom_call.1} parent=39 // pred_check_branch
          %261 = sbr.rel (%p259) target = $region48
        $region47: #{tpu_custom_call.1} parent=39 // pred_region
          %262 = dma.done [#allocation7], 2048
        $region48: #{tpu_custom_call.1} parent=39 // pred_fallthru
          _
        // Predicated region
        $region49: #{tpu_custom_call.1} parent=39 // pred_check
          %p263 = pneg %p121
        $region50: #{tpu_custom_call.1} parent=39 // pred_check_branch
          %265 = sbr.rel (%p263) target = $region52
        $region51: #{tpu_custom_call.1} parent=39 // pred_region
          %266 = dma.done [#allocation7], 2048
        $region52: #{tpu_custom_call.1} parent=39 // pred_fallthru
          _
        %s267 = sand.u32 %s45, 1
        %s268 = scalar_lea.sflag [#allocation4], %s267
        %s269 = sand.u32 %s45, 1
        %s270 = smul.addr %s269, 128
        %s271 = scalar_lea.vmem [#allocation3], %s270
        %p272 = pneg %p58
        %p273 = pneg %p55
        %p274 = pneg %p79
        %p275 = pneg %p76
        %p276 = pneg %p100
        %p277 = pneg %p97
        %p278 = pneg %p121
        %p279 = pneg %p118
        %p280 = pneg %p142
        %p281 = pneg %p139
        %p282 = pneg %p168
        %p283 = pneg %p165
        %s284 = sand.u32 %s155, 1
        %s285 = scalar_lea.sflag [#allocation5], %s284
        %s286 = sand.u32 %s155, 1
        %s287 = smul.addr %s286, 8
        %s288 = scalar_lea.vmem [#allocation9], %s287
        %s289 = smul.u32 8, %s27
        %s290 = smul.u32 2, %s28
        %p292 = scmp.eq.s32.totalorder %s28, 0
        // Predicated region
        $region53: #{tpu_custom_call.1} parent=39 // pred_check
          %p293 = pneg %p292
        $region54: #{tpu_custom_call.1} parent=39 // pred_check_branch
          %295 = sbr.rel (%p293) target = $region56
        $region55: #{tpu_custom_call.1} parent=39 // pred_region
          %296 = vst [vmem:[#allocation2] sm:$0xff] 0.0
        $region56: #{tpu_custom_call.1} parent=39 // pred_fallthru
          _
        %v297 = vld [vmem:[#allocation2] sm:$0xff]
        %v298 = vld [vmem:[%s254] sm:$0xff]
        %v299 = vld [vmem:[%s254 + $0x8] sm:$0xff]
        %v300 = vld [vmem:[%s254 + $0x10] sm:$0xff]
        %v301 = vld [vmem:[%s254 + $0x18] sm:$0xff]
        %v302 = vld [vmem:[%s254 + $0x20] sm:$0xff]
        %v303 = vld [vmem:[%s254 + $0x28] sm:$0xff]
        %v304 = vld [vmem:[%s254 + $0x30] sm:$0xff]
        %v305 = vld [vmem:[%s254 + $0x38] sm:$0xff]
        %v306 = vld [vmem:[%s254 + $0x40] sm:$0xff]
        %v307 = vld [vmem:[%s254 + $0x48] sm:$0xff]
        %v308 = vld [vmem:[%s254 + $0x50] sm:$0xff]
        %v309 = vld [vmem:[%s254 + $0x58] sm:$0xff]
        %v310 = vld [vmem:[%s254 + $0x60] sm:$0xff]
        %v311 = vld [vmem:[%s254 + $0x68] sm:$0xff]
        %v312 = vld [vmem:[%s254 + $0x70] sm:$0xff]
        %v313 = vld [vmem:[%s254 + $0x78] sm:$0xff]
        %v314 = vadd.f32 %v298, %v299
        %v315 = vrot.slane %v314, 4
        %v316 = vadd.f32 %v314, %v315
        %v317 = vrot.slane %v316, 2
        %v318 = vadd.f32 %v316, %v317
        %v319 = vrot.slane %v318, 1
        %v320 = vadd.f32 %v318, %v319
        %v321 = vadd.f32 %v300, %v301
        %v322 = vrot.slane %v321, 4
        %v323 = vadd.f32 %v321, %v322
        %v324 = vrot.slane %v323, 2
        %v325 = vadd.f32 %v323, %v324
        %v326 = vrot.slane %v325, 1
        %v327 = vadd.f32 %v325, %v326
        %v328 = vadd.f32 %v302, %v303
        %v329 = vrot.slane %v328, 4
        %v330 = vadd.f32 %v328, %v329
        %v331 = vrot.slane %v330, 2
        %v332 = vadd.f32 %v330, %v331
        %v333 = vrot.slane %v332, 1
        %v334 = vadd.f32 %v332, %v333
        %v335 = vadd.f32 %v304, %v305
        %v336 = vrot.slane %v335, 4
        %v337 = vadd.f32 %v335, %v336
        %v338 = vrot.slane %v337, 2
        %v339 = vadd.f32 %v337, %v338
        %v340 = vrot.slane %v339, 1
        %v341 = vadd.f32 %v339, %v340
        %v342 = vadd.f32 %v306, %v307
        %v343 = vrot.slane %v342, 4
        %v344 = vadd.f32 %v342, %v343
        %v345 = vrot.slane %v344, 2
        %v346 = vadd.f32 %v344, %v345
        %v347 = vrot.slane %v346, 1
        %v348 = vadd.f32 %v346, %v347
        %v349 = vadd.f32 %v308, %v309
        %v350 = vrot.slane %v349, 4
        %v351 = vadd.f32 %v349, %v350
        %v352 = vrot.slane %v351, 2
        %v353 = vadd.f32 %v351, %v352
        %v354 = vrot.slane %v353, 1
        %v355 = vadd.f32 %v353, %v354
        %v356 = vadd.f32 %v310, %v311
        %v357 = vrot.slane %v356, 4
        %v358 = vadd.f32 %v356, %v357
        %v359 = vrot.slane %v358, 2
        %v360 = vadd.f32 %v358, %v359
        %v361 = vrot.slane %v360, 1
        %v362 = vadd.f32 %v360, %v361
        %v363 = vadd.f32 %v312, %v313
        %v364 = vrot.slane %v363, 4
        %v365 = vadd.f32 %v363, %v364
        %v366 = vrot.slane %v365, 2
        %v367 = vadd.f32 %v365, %v366
        %v368 = vrot.slane %v367, 1
        %v369 = vadd.f32 %v367, %v368
        %vm378 = vcmask 1041409
        %v379 = vsel %vm378, %v327, %v320
        %vm380 = vcmask 1042434
        %v381 = vsel %vm380, %v334, %v379
        %vm382 = vcmask 1043459
        %v383 = vsel %vm382, %v341, %v381
        %vm384 = vcmask 1044484
        %v385 = vsel %vm384, %v348, %v383
        %vm386 = vcmask 1045509
        %v387 = vsel %vm386, %v355, %v385
        %vm388 = vcmask 1046534
        %v389 = vsel %vm388, %v362, %v387
        %vm390 = vcmask 1047559
        %v391 = vsel %vm390, %v369, %v389
        %v393 = vadd.f32 %v297, %v391
        %394 = vst [vmem:[#allocation2] sm:$0xff] %v393
        // Predicated region
        $region57: #{tpu_custom_call.1} parent=39 // pred_check
          %p395 = pneg %p292
        $region58: #{tpu_custom_call.1} parent=39 // pred_check_branch
          %397 = sbr.rel (%p395) target = $region60
        $region59: #{tpu_custom_call.1} parent=39 // pred_region
          %v398 = vld [vmem:[#allocation2] sm:$0xff]
          %v399 = vmul.f32 %v398, 0.0625
          %v400 = vpack.c.bf16 %v399, %v399
          %v401 = vld [vmem:[#allocation6] sm:$0xff]
          %v402 = vld [vmem:[#allocation6 + $0x8] sm:$0xff]
          %v403 = vld [vmem:[#allocation6 + $0x10] sm:$0xff]
          %v404 = vld [vmem:[#allocation6 + $0x18] sm:$0xff]
          %v405 = vld [vmem:[#allocation6 + $0x20] sm:$0xff]
          %v406 = vld [vmem:[#allocation6 + $0x28] sm:$0xff]
          %v407 = vld [vmem:[#allocation6 + $0x30] sm:$0xff]
          %v408 = vld [vmem:[#allocation6 + $0x38] sm:$0xff]
          %v409 = vld [vmem:[#allocation6 + $0x40] sm:$0xff]
          %v410 = vld [vmem:[#allocation6 + $0x48] sm:$0xff]
          %v411 = vld [vmem:[#allocation6 + $0x50] sm:$0xff]
          %v412 = vld [vmem:[#allocation6 + $0x58] sm:$0xff]
          %v413 = vld [vmem:[#allocation6 + $0x60] sm:$0xff]
          %v414 = vld [vmem:[#allocation6 + $0x68] sm:$0xff]
          %v415 = vld [vmem:[#allocation6 + $0x70] sm:$0xff]
          %v416 = vld [vmem:[#allocation6 + $0x78] sm:$0xff]
          %v417 = vld [vmem:[%s2] sm:$0x3]
          %v419 = vlaneseq
          %v420 = vshrl.u32 %v419, 7
          %v421 = vsub.s32 0, %v420
          %v422 = vrot.slane %v417, %v421
          %v423 = vlaneseq
          %v424 = vshrl.u32 %v423, 7
          %v425 = vsub.s32 1, %v424
          %v426 = vrot.slane %v417, %v425
          %v445 = vunpack.c.l.b16 %v401
          %v446 = vunpack.c.h.b16 %v401
          %v447 = vunpack.c.l.b16 %v402
          %v448 = vunpack.c.h.b16 %v402
          %v449 = vunpack.c.l.b16 %v403
          %v450 = vunpack.c.h.b16 %v403
          %v451 = vunpack.c.l.b16 %v404
          %v452 = vunpack.c.h.b16 %v404
          %v453 = vunpack.c.l.b16 %v405
          %v454 = vunpack.c.h.b16 %v405
          %v455 = vunpack.c.l.b16 %v406
          %v456 = vunpack.c.h.b16 %v406
          %v457 = vunpack.c.l.b16 %v407
          %v458 = vunpack.c.h.b16 %v407
          %v459 = vunpack.c.l.b16 %v408
          %v460 = vunpack.c.h.b16 %v408
          %v461 = vunpack.c.l.b16 %v409
          %v462 = vunpack.c.h.b16 %v409
          %v463 = vunpack.c.l.b16 %v410
          %v464 = vunpack.c.h.b16 %v410
          %v465 = vunpack.c.l.b16 %v411
          %v466 = vunpack.c.h.b16 %v411
          %v467 = vunpack.c.l.b16 %v412
          %v468 = vunpack.c.h.b16 %v412
          %v469 = vunpack.c.l.b16 %v413
          %v470 = vunpack.c.h.b16 %v413
          %v471 = vunpack.c.l.b16 %v414
          %v472 = vunpack.c.h.b16 %v414
          %v473 = vunpack.c.l.b16 %v415
          %v474 = vunpack.c.h.b16 %v415
          %v475 = vunpack.c.l.b16 %v416
          %v476 = vunpack.c.h.b16 %v416
          %v477 = vpack.c.b16 %v447, %v445
          %v478 = vpack.c.b16 %v448, %v446
          %v479 = vpack.c.b16 %v451, %v449
          %v480 = vpack.c.b16 %v452, %v450
          %v481 = vpack.c.b16 %v455, %v453
          %v482 = vpack.c.b16 %v456, %v454
          %v483 = vpack.c.b16 %v459, %v457
          %v484 = vpack.c.b16 %v460, %v458
          %v485 = vpack.c.b16 %v463, %v461
          %v486 = vpack.c.b16 %v464, %v462
          %v487 = vpack.c.b16 %v467, %v465
          %v488 = vpack.c.b16 %v468, %v466
          %v489 = vpack.c.b16 %v471, %v469
          %v490 = vpack.c.b16 %v472, %v470
          %v491 = vpack.c.b16 %v475, %v473
          %v492 = vpack.c.b16 %v476, %v474
          %509 = vmatprep.subr.bf16.mxu0 %v478
          %510 = vmatpush1.bf16.msra.mxu0 %v477
          %511 = vmatprep.subr.bf16.mxu0 %v480
          %512 = vmatpush1.bf16.msra.mxu0 %v479
          %513 = vmatprep.subr.bf16.mxu0 %v482
          %514 = vmatpush1.bf16.msra.mxu0 %v481
          %515 = vmatprep.subr.bf16.mxu0 %v484
          %516 = vmatpush1.bf16.msra.mxu0 %v483
          %517 = vmatprep.subr.bf16.mxu0 %v486
          %518 = vmatpush1.bf16.msra.mxu0 %v485
          %519 = vmatprep.subr.bf16.mxu0 %v488
          %520 = vmatpush1.bf16.msra.mxu0 %v487
          %521 = vmatprep.subr.bf16.mxu0 %v490
          %522 = vmatpush1.bf16.msra.mxu0 %v489
          %523 = vmatprep.subr.bf16.mxu0 %v492
          %524 = vmatpush1.bf16.msra.mxu0 %v491
          %525 = vmatprep.subr.bf16.mxu0 0
          %526 = vmatpush1.bf16.msra.mxu0 0
          %527 = vmatprep.subr.bf16.mxu0 0
          %528 = vmatpush1.bf16.msra.mxu0 0
          %529 = vmatprep.subr.bf16.mxu0 0
          %530 = vmatpush1.bf16.msra.mxu0 0
          %531 = vmatprep.subr.bf16.mxu0 0
          %532 = vmatpush1.bf16.msra.mxu0 0
          %533 = vmatprep.subr.bf16.mxu0 0
          %534 = vmatpush1.bf16.msra.mxu0 0
          %535 = vmatprep.subr.bf16.mxu0 0
          %536 = vmatpush1.bf16.msra.mxu0 0
          %537 = vmatprep.subr.bf16.mxu0 0
          %538 = vmatpush1.bf16.msra.mxu0 0
          %539 = vmatprep.subr.bf16.mxu0 0
          %540 = vmatpush1.bf16.msra.mxu0 0
          %541 = vmatprep.mubr.bf16.mxu0 0
          %542 = vmatmul.mubr.bf16.gmra.mrb[0].mxu0 %v400
          %v543 = vpop.f32.mrb[0].mxu0
          %v544 = vadd.f32 %v422, %v543
          %v545 = vpop.f32.mrb[0].mxu0
          %v546 = vadd.f32 %v426, %v545
          %v547 = vpop.f32.mrb[0].mxu0
          %v548 = vpop.f32.mrb[0].mxu0
          %549 = vdwg.mxu0
          %v550 = vpack.c.bf16 %v544, %v544
          %v551 = vpack.c.bf16 %v546, %v546
          %v552 = vld [vmem:[#allocation8] sm:$0xf]
          %v553 = vld [vmem:[#allocation8 + $0x4] sm:$0xf]
          %v554 = vld [vmem:[#allocation8 + $0x8] sm:$0xf]
          %v555 = vld [vmem:[#allocation8 + $0xc] sm:$0xf]
          %v556 = vld [vmem:[#allocation8 + $0x10] sm:$0xf]
          %v557 = vld [vmem:[#allocation8 + $0x14] sm:$0xf]
          %v558 = vld [vmem:[#allocation8 + $0x18] sm:$0xf]
          %v559 = vld [vmem:[#allocation8 + $0x1c] sm:$0xf]
          %v560 = vld [vmem:[#allocation8 + $0x20] sm:$0xf]
          %v561 = vld [vmem:[#allocation8 + $0x24] sm:$0xf]
          %v562 = vld [vmem:[#allocation8 + $0x28] sm:$0xf]
          %v563 = vld [vmem:[#allocation8 + $0x2c] sm:$0xf]
          %v564 = vld [vmem:[#allocation8 + $0x30] sm:$0xf]
          %v565 = vld [vmem:[#allocation8 + $0x34] sm:$0xf]
          %v566 = vld [vmem:[#allocation8 + $0x38] sm:$0xf]
          %v567 = vld [vmem:[#allocation8 + $0x3c] sm:$0xf]
          %v568 = vld [vmem:[#allocation8 + $0x40] sm:$0xf]
          %v569 = vld [vmem:[#allocation8 + $0x44] sm:$0xf]
          %v570 = vld [vmem:[#allocation8 + $0x48] sm:$0xf]
          %v571 = vld [vmem:[#allocation8 + $0x4c] sm:$0xf]
          %v572 = vld [vmem:[#allocation8 + $0x50] sm:$0xf]
          %v573 = vld [vmem:[#allocation8 + $0x54] sm:$0xf]
          %v574 = vld [vmem:[#allocation8 + $0x58] sm:$0xf]
          %v575 = vld [vmem:[#allocation8 + $0x5c] sm:$0xf]
          %v576 = vld [vmem:[#allocation8 + $0x60] sm:$0xf]
          %v577 = vld [vmem:[#allocation8 + $0x64] sm:$0xf]
          %v578 = vld [vmem:[#allocation8 + $0x68] sm:$0xf]
          %v579 = vld [vmem:[#allocation8 + $0x6c] sm:$0xf]
          %v580 = vld [vmem:[#allocation8 + $0x70] sm:$0xf]
          %v581 = vld [vmem:[#allocation8 + $0x74] sm:$0xf]
          %v582 = vld [vmem:[#allocation8 + $0x78] sm:$0xf]
          %v583 = vld [vmem:[#allocation8 + $0x7c] sm:$0xf]
          %v584 = vld [vmem:[%s4] sm:$0x1]
          %v586 = vlaneseq
          %v587 = vshrl.u32 %v586, 7
          %v588 = vsub.s32 0, %v587
          %v589 = vrot.slane %v584, %v588
          %v623 = vunpack.c.l.b16 %v552
          %v624 = vunpack.c.l.b16 %v553
          %v625 = vunpack.c.l.b16 %v554
          %v626 = vunpack.c.l.b16 %v555
          %v627 = vunpack.c.l.b16 %v556
          %v628 = vunpack.c.l.b16 %v557
          %v629 = vunpack.c.l.b16 %v558
          %v630 = vunpack.c.l.b16 %v559
          %v631 = vunpack.c.l.b16 %v560
          %v632 = vunpack.c.l.b16 %v561
          %v633 = vunpack.c.l.b16 %v562
          %v634 = vunpack.c.l.b16 %v563
          %v635 = vunpack.c.l.b16 %v564
          %v636 = vunpack.c.l.b16 %v565
          %v637 = vunpack.c.l.b16 %v566
          %v638 = vunpack.c.l.b16 %v567
          %v639 = vunpack.c.l.b16 %v568
          %v640 = vunpack.c.l.b16 %v569
          %v641 = vunpack.c.l.b16 %v570
          %v642 = vunpack.c.l.b16 %v571
          %v643 = vunpack.c.l.b16 %v572
          %v644 = vunpack.c.l.b16 %v573
          %v645 = vunpack.c.l.b16 %v574
          %v646 = vunpack.c.l.b16 %v575
          %v647 = vunpack.c.l.b16 %v576
          %v648 = vunpack.c.l.b16 %v577
          %v649 = vunpack.c.l.b16 %v578
          %v650 = vunpack.c.l.b16 %v579
          %v651 = vunpack.c.l.b16 %v580
          %v652 = vunpack.c.l.b16 %v581
          %v653 = vunpack.c.l.b16 %v582
          %v654 = vunpack.c.l.b16 %v583
          %v655 = vpack.c.b16 %v624, %v623
          %v656 = vpack.c.b16 %v626, %v625
          %v657 = vpack.c.b16 %v628, %v627
          %v658 = vpack.c.b16 %v630, %v629
          %v659 = vpack.c.b16 %v632, %v631
          %v660 = vpack.c.b16 %v634, %v633
          %v661 = vpack.c.b16 %v636, %v635
          %v662 = vpack.c.b16 %v638, %v637
          %v663 = vpack.c.b16 %v640, %v639
          %v664 = vpack.c.b16 %v642, %v641
          %v665 = vpack.c.b16 %v644, %v643
          %v666 = vpack.c.b16 %v646, %v645
          %v667 = vpack.c.b16 %v648, %v647
          %v668 = vpack.c.b16 %v650, %v649
          %v669 = vpack.c.b16 %v652, %v651
          %v670 = vpack.c.b16 %v654, %v653
          %687 = vmatprep.subr.bf16.mxu0 0
          %688 = vmatpush1.bf16.msra.mxu0 %v655
          %689 = vmatprep.subr.bf16.mxu0 0
          %690 = vmatpush1.bf16.msra.mxu0 %v656
          %691 = vmatprep.subr.bf16.mxu0 0
          %692 = vmatpush1.bf16.msra.mxu0 %v657
          %693 = vmatprep.subr.bf16.mxu0 0
          %694 = vmatpush1.bf16.msra.mxu0 %v658
          %695 = vmatprep.subr.bf16.mxu0 0
          %696 = vmatpush1.bf16.msra.mxu0 %v659
          %697 = vmatprep.subr.bf16.mxu0 0
          %698 = vmatpush1.bf16.msra.mxu0 %v660
          %699 = vmatprep.subr.bf16.mxu0 0
          %700 = vmatpush1.bf16.msra.mxu0 %v661
          %701 = vmatprep.subr.bf16.mxu0 0
          %702 = vmatpush1.bf16.msra.mxu0 %v662
          %703 = vmatprep.subr.bf16.mxu0 0
          %704 = vmatpush1.bf16.msra.mxu0 %v663
          %705 = vmatprep.subr.bf16.mxu0 0
          %706 = vmatpush1.bf16.msra.mxu0 %v664
          %707 = vmatprep.subr.bf16.mxu0 0
          %708 = vmatpush1.bf16.msra.mxu0 %v665
          %709 = vmatprep.subr.bf16.mxu0 0
          %710 = vmatpush1.bf16.msra.mxu0 %v666
          %711 = vmatprep.subr.bf16.mxu0 0
          %712 = vmatpush1.bf16.msra.mxu0 %v667
          %713 = vmatprep.subr.bf16.mxu0 0
          %714 = vmatpush1.bf16.msra.mxu0 %v668
          %715 = vmatprep.subr.bf16.mxu0 0
          %716 = vmatpush1.bf16.msra.mxu0 %v669
          %717 = vmatprep.subr.bf16.mxu0 0
          %718 = vmatpush1.bf16.msra.mxu0 %v670
          %719 = vmatprep.mubr.bf16.mxu0 %v551
          %720 = vmatmul.mubr.bf16.gmra.mrb[0].mxu0 %v550
          %v721 = vpop.f32.mrb[0].mxu0
          %v722 = vadd.f32 %v589, %v721
          %v723 = vpop.f32.mrb[0].mxu0
          %v724 = vpop.f32.mrb[0].mxu0
          %v725 = vpop.f32.mrb[0].mxu0
          %726 = vdwg.mxu0
          %727 = vst [vmem:[%s288] sm:$0xff] %v722
        $region60: #{tpu_custom_call.1} parent=39 // pred_fallthru
          _
        %s728 = sand.u32 %s155, 1
        %s729 = scalar_lea.sflag [#allocation5], %s728
        %s730 = sand.u32 %s155, 1
        %s731 = smul.addr %s730, 8
        %s732 = scalar_lea.vmem [#allocation9], %s731
        // Predicated region
        $region61: #{tpu_custom_call.1} parent=39 // pred_check
          %p733 = pneg %p165
        $region62: #{tpu_custom_call.1} parent=39 // pred_check_branch
          %735 = sbr.rel (%p733) target = $region64
        $region63: #{tpu_custom_call.1} parent=39 // pred_region
          %s737 = ssub.s32 128, 128
          %738 = vsyncadd %s729, %s737
          %s739 = smul.addr %s27, 128
          %s740 = scalar_lea.hbm %s5, %s739
          %s742 = sshll.u32 %s732, 4
          %s743 = int_to_ptr.vmem [resolvable:$true] %s742
          %745 = dma.vmem_to_hbm [thread:$0]  %s743, 128, %s740, %s729
        $region64: #{tpu_custom_call.1} parent=39 // pred_fallthru
          _
      $region40: #{tpu_custom_call.1} parent=5 // pred_fallthru
        _
      %p746 = scmp.le.s32.totalorder 2, %s18
      // Predicated region
      $region65: #{tpu_custom_call.1} parent=5 // pred_check
        %p747 = pneg %p746
      $region66: #{tpu_custom_call.1} parent=5 // pred_check_branch
        %749 = sbr.rel (%p747) target = $region68
      $region67: #{tpu_custom_call.1} parent=5 // pred_region
        %s750 = ssub.s32 %s18, 2
        // Predicated region
        $region69: #{tpu_custom_call.1} parent=67 // pred_check
          %p751 = pneg %p171
        $region70: #{tpu_custom_call.1} parent=67 // pred_check_branch
          %753 = sbr.rel (%p751) target = $region72
        $region71: #{tpu_custom_call.1} parent=67 // pred_region
          %s754 = sand.u32 %s156, 1
          %s755 = scalar_lea.sflag [#allocation5], %s754
          %s756 = sand.u32 %s156, 1
          %s757 = smul.addr %s756, 8
          %s758 = scalar_lea.vmem [#allocation9], %s757
          %759 = dma.done %s755, 128
        $region72: #{tpu_custom_call.1} parent=67 // pred_fallthru
          _
      $region68: #{tpu_custom_call.1} parent=5 // pred_fallthru
        _
    $region6: #{tpu_custom_call.1} parent=1 // loop_footer
      %s22 = sadd.s32 1, %s18
    $region7: #{tpu_custom_call.1} parent=1 // loop_footer_branch
      %17 = sbr.rel target = $region3
    $region8: #{tpu_custom_call.1} parent=1 // loop_exit
      _
    %760 = vsyncpa [#allocation4], 1
    %s761 = scalar_lea.sflag [#allocation4], 1
    %762 = vsyncpa %s761, 1
    %763 = vsyncpa [#allocation7], 1
    %764 = vsyncpa [#allocation5], 1
    %s765 = scalar_lea.sflag [#allocation5], 1
    %766 = vsyncpa %s765, 1

</llo_original>
